<compile_context>
chip_gen: v6e
topology: v6e:2x2x1
jax: 0.10.0
libtpu: 0.0.40
codegen_flags: <defaults>
</compile_context>

<pallas_src>
import functools

import jax
import jax.numpy as jnp
from jax.experimental import pallas as pl
from jax.experimental.pallas import tpu as pltpu


def _round_up(n, m):
    return ((n + m - 1) // m) * m


# --------------------------------------------------------------------------------------
# Aggregate-first kernel (F_in < F_out): carry the narrow F_in through the aggregation,
# apply W at finalize.   z = A @ (r_src * X);  out = ReLU(r_dst * z @ W + b)
# Grid = (dst tiles [parallel], src tiles [arbitrary / reduction]).
# --------------------------------------------------------------------------------------
def _agg_first_kernel(a_ref, x_ref, rsrc_ref, rdst_ref, w_ref, b_ref, o_ref, acc_ref):
    k = pl.program_id(1)

    @pl.when(k == 0)
    def _init():
        acc_ref[...] = jnp.zeros_like(acc_ref)

    # m = r_src * X, cast to bf16 so A @ m uses the native bf16 MXU path (f32 accumulate).
    m = (x_ref[...] * rsrc_ref[...]).astype(jnp.bfloat16)
    acc_ref[...] += jnp.dot(a_ref[...], m, preferred_element_type=jnp.float32)

    @pl.when(k == pl.num_programs(1) - 1)
    def _finalize():
        z = acc_ref[...] * rdst_ref[...]                       # fold D_dst^{-1/2}
        z = jnp.dot(z.astype(jnp.bfloat16), w_ref[...],       # small bf16 matmul, f32 acc
                    preferred_element_type=jnp.float32)
        o_ref[...] = jnp.maximum(z + b_ref[...], 0.0).astype(o_ref.dtype)


# --------------------------------------------------------------------------------------
# Transform-first kernel (F_in >= F_out): apply W before aggregation and carry the narrow
# F_out.  Accumulates directly into the f32 output block (no scratch).
#   out = ReLU(r_dst * (A @ (r_src * (X @ W))) + b)
# --------------------------------------------------------------------------------------
def _transform_first_kernel(a_ref, x_ref, w_ref, rsrc_ref, rdst_ref, b_ref, o_ref):
    k = pl.program_id(1)

    @pl.when(k == 0)
    def _init():
        o_ref[...] = jnp.zeros_like(o_ref)

    # m = r_src * (X @ W); recomputed per dst tile — trivial vs. the A @ m matmul.
    xw = jnp.dot(x_ref[...].astype(jnp.bfloat16), w_ref[...],
                 preferred_element_type=jnp.float32)
    m = (xw * rsrc_ref[...]).astype(jnp.bfloat16)
    o_ref[...] += jnp.dot(a_ref[...], m, preferred_element_type=jnp.float32)

    @pl.when(k == pl.num_programs(1) - 1)
    def _finalize():
        o_ref[...] = jnp.maximum(o_ref[...] * rdst_ref[...] + b_ref[...],
                                 0.0).astype(o_ref.dtype)


# --------------------------------------------------------------------------------------
# One GraphConv layer.
# --------------------------------------------------------------------------------------
def gcn_layer(a, x, w, b, *, out_dtype=jnp.float32, tile_dst=1024, tile_src=512):
    """ReLU( D_dst^{-1/2} A D_src^{-1/2} X W + b ) with dense adjacency a: (n_dst, n_src)."""
    n_dst, n_src = a.shape
    f_in, f_out = w.shape
    assert x.shape == (n_src, f_in)

    # ---- global degree normalizers (clamp BEFORE padding; no f32 copy of A) ----------
    r_src = jax.lax.rsqrt(jnp.maximum(jnp.sum(a, axis=0, dtype=jnp.float32), 1.0))
    r_dst = jax.lax.rsqrt(jnp.maximum(jnp.sum(a, axis=1, dtype=jnp.float32), 1.0))

    aggregate_first = f_in < f_out            # carry the narrower width through A @ M

    # ---- TPU-friendly padding / tile selection ----------------------------------------
    f_in_p = _round_up(f_in, 128)
    f_out_p = _round_up(f_out, 128)

    tile_dst = _round_up(tile_dst, 16)
    tile_src = _round_up(tile_src, 128)

    # dst tile: multiple of 16 (bf16 sublane packing). Keep >= 2 dst tiles when possible so
    # the "parallel" grid axis load-balances across v7x's 2 TensorCores.
    tm_full = _round_up(n_dst, 16)
    if tm_full > tile_dst:
        tm = tile_dst
    elif tm_full > 256:
        tm = _round_up((n_dst + 1) // 2, 16)
    else:
        tm = tm_full
    ts = min(tile_src, _round_up(n_src, 128))   # src tile (lane axis of A): multiple of 128
    n_dst_p = _round_up(n_dst, tm)
    n_src_p = _round_up(n_src, ts)

    # NOTE: bf16 A is exact only for unweighted 0/1 sampled blocks (the module's use case).
    a_p = jnp.pad(a.astype(jnp.bfloat16), ((0, n_dst_p - n_dst), (0, n_src_p - n_src)))
    x_p = jnp.pad(x, ((0, n_src_p - n_src), (0, f_in_p - f_in)))
    w_p = jnp.pad(w.astype(jnp.bfloat16), ((0, f_in_p - f_in), (0, f_out_p - f_out)))
    b_p = jnp.pad(b.astype(jnp.float32).reshape(1, f_out), ((0, 0), (0, f_out_p - f_out)))
    r_src_p = jnp.pad(r_src.reshape(n_src, 1), ((0, n_src_p - n_src), (0, 0)))
    r_dst_p = jnp.pad(r_dst.reshape(n_dst, 1), ((0, n_dst_p - n_dst), (0, 0)))

    grid = (n_dst_p // tm, n_src_p // ts)
    cp = pltpu.CompilerParams(
        dimension_semantics=("parallel", "arbitrary"),
        # ~5 MiB live VMEM at default tiles; 32 MiB is explicit+safe on v5e/v6e/v7x.
        vmem_limit_bytes=32 * 1024 * 1024,
    )

    if aggregate_first:
        out_p = pl.pallas_call(
            _agg_first_kernel,
            out_shape=jax.ShapeDtypeStruct((n_dst_p, f_out_p), out_dtype),
            grid=grid,
            in_specs=[
                pl.BlockSpec((tm, ts), lambda i, k: (i, k)),           # A (bf16, dominant)
                pl.BlockSpec((ts, f_in_p), lambda i, k: (k, 0)),       # X
                pl.BlockSpec((ts, 1), lambda i, k: (k, 0)),            # r_src
                pl.BlockSpec((tm, 1), lambda i, k: (i, 0)),            # r_dst
                pl.BlockSpec((f_in_p, f_out_p), lambda i, k: (0, 0)),  # W (bf16)
                pl.BlockSpec((1, f_out_p), lambda i, k: (0, 0)),       # bias
            ],
            out_specs=pl.BlockSpec((tm, f_out_p), lambda i, k: (i, 0)),
            scratch_shapes=[pltpu.VMEM((tm, f_in_p), jnp.float32)],
            compiler_params=cp,
        )(a_p, x_p, r_src_p, r_dst_p, w_p, b_p)
    else:
        out_p = pl.pallas_call(
            _transform_first_kernel,
            # f32 output so the per-k accumulation happens in place (no scratch).
            out_shape=jax.ShapeDtypeStruct((n_dst_p, f_out_p), jnp.float32),
            grid=grid,
            in_specs=[
                pl.BlockSpec((tm, ts), lambda i, k: (i, k)),           # A (bf16, dominant)
                pl.BlockSpec((ts, f_in_p), lambda i, k: (k, 0)),       # X
                pl.BlockSpec((f_in_p, f_out_p), lambda i, k: (0, 0)),  # W (bf16)
                pl.BlockSpec((ts, 1), lambda i, k: (k, 0)),            # r_src
                pl.BlockSpec((tm, 1), lambda i, k: (i, 0)),            # r_dst
                pl.BlockSpec((1, f_out_p), lambda i, k: (0, 0)),       # bias
            ],
            out_specs=pl.BlockSpec((tm, f_out_p), lambda i, k: (i, 0)),
            compiler_params=cp,
        )(a_p, x_p, w_p, r_src_p, r_dst_p, b_p)
        if out_dtype != jnp.float32:
            out_p = out_p.astype(out_dtype)

    # slice off node / lane padding
    return out_p[:n_dst, :f_out]


def stochastic_two_layer_rgcn(blocks, x, params, *, tile_dst=1024, tile_src=512):
    """Forward pass: x = conv2(blocks[1], conv1(blocks[0], x)).

    The intermediate h is carried in bf16 (halves its HBM round trip); the final output
    is f32.
    """
    (w1, b1), (w2, b2) = params
    h = gcn_layer(blocks[0], x, w1, b1, out_dtype=jnp.bfloat16,
                  tile_dst=tile_dst, tile_src=tile_src)
    out = gcn_layer(blocks[1], h, w2, b2, out_dtype=jnp.float32,
                    tile_dst=tile_dst, tile_src=tile_src)
    return out


def _reference(blocks, x, params):
    # pure-JAX f32 reference for the correctness check
    h = x
    for a, (w, b) in zip(blocks, params):
        a = a.astype(jnp.float32)
        r_src = 1.0 / jnp.sqrt(jnp.maximum(a.sum(axis=0), 1.0))
        r_dst = 1.0 / jnp.sqrt(jnp.maximum(a.sum(axis=1), 1.0))
        h = jnp.maximum(r_dst[:, None] * (a @ (r_src[:, None] * (h @ w))) + b[None, :], 0.0)
    return h


if __name__ == "__main__":
    key = jax.random.PRNGKey(0)

    # moderately sized sampled blocks so the (dst, src) grid is genuinely multi-tile
    N0, N1, N2 = 512, 384, 256                     # src(layer1), src(layer2), final dst nodes
    in_feat, hidden_feat, out_feat = 16, 32, 8

    k_a0, k_a1, k_x, k_w1, k_b1, k_w2, k_b2 = jax.random.split(key, 7)

    # dense 0/1 adjacencies for the two sampled blocks, already in bf16 (0/1 exact)
    a0 = (jax.random.uniform(k_a0, (N1, N0)) < 0.05).astype(jnp.bfloat16)   # block[0]: N0 -> N1
    a1 = (jax.random.uniform(k_a1, (N2, N1)) < 0.05).astype(jnp.bfloat16)   # block[1]: N1 -> N2

    x = jax.random.normal(k_x, (N0, in_feat), dtype=jnp.float32)

    w1 = jax.random.normal(k_w1, (in_feat, hidden_feat), dtype=jnp.float32) / jnp.sqrt(in_feat)
    b1 = jax.random.normal(k_b1, (hidden_feat,), dtype=jnp.float32) * 0.01
    w2 = jax.random.normal(k_w2, (hidden_feat, out_feat), dtype=jnp.float32) / jnp.sqrt(hidden_feat)
    b2 = jax.random.normal(k_b2, (out_feat,), dtype=jnp.float32) * 0.01

    params = ((w1, b1), (w2, b2))
    blocks = (a0, a1)

    ref = _reference(blocks, x, params)

    # bf16 A / bf16 M / bf16 h -> compare against the f32 reference with a loose tolerance.
    tol = dict(atol=5e-2, rtol=5e-2)

    # (1) small tiles: exercises multi-step (dst, src) grids + init/finalize accumulation
    fwd_small = jax.jit(functools.partial(stochastic_two_layer_rgcn, tile_dst=128, tile_src=128))
    out_small = jax.block_until_ready(fwd_small(blocks, x, params))
    assert out_small.shape == (N2, out_feat)
    err = float(jnp.max(jnp.abs(out_small - ref)))
    assert jnp.allclose(out_small, ref, **tol), f"mismatch vs reference (max abs err {err})"

    # (2) production-default tiles: exercises the dst-axis split (megacore balance) path
    fwd_big = jax.jit(stochastic_two_layer_rgcn)
    out_big = jax.block_until_ready(fwd_big(blocks, x, params))
    err = float(jnp.max(jnp.abs(out_big - ref)))
    assert jnp.allclose(out_big, ref, **tol), f"mismatch vs reference (max abs err {err})"

    print("KERNEL_OK")
</pallas_src>

<mosaic_0001>
module attributes {stable_mosaic.version = 11 : i64} {
  func.func @_agg_first_kernel(%arg0: i32, %arg1: i32, %arg2: memref<128x128xbf16, #tpu.memory_space<vmem>>, %arg3: memref<128x128xf32, #tpu.memory_space<vmem>>, %arg4: memref<128x1xf32, #tpu.memory_space<vmem>>, %arg5: memref<128x1xf32, #tpu.memory_space<vmem>>, %arg6: memref<128x128xbf16, #tpu.memory_space<vmem>>, %arg7: memref<1x128xf32, #tpu.memory_space<vmem>>, %arg8: memref<128x128xbf16, #tpu.memory_space<vmem>>, %arg9: memref<128x128xf32, #tpu.memory_space<vmem>>) attributes {dimension_semantics = [#tpu.dimension_semantics<parallel>, #tpu.dimension_semantics<arbitrary>], iteration_bounds = array<i64: 3, 4>, scalar_prefetch = 0 : i64, scratch_operands = 1 : i64, tpu.core_type = #tpu.core_type<tc>, window_params = [{transform_indices = @transform_0, window_bounds = array<i64: 128, 128>}, {transform_indices = @transform_1, window_bounds = array<i64: 128, 128>}, {transform_indices = @transform_2, window_bounds = array<i64: 128, 1>}, {transform_indices = @transform_3, window_bounds = array<i64: 128, 1>}, {pipeline_mode = #tpu.pipeline_mode<synchronous>, transform_indices = @transform_4, window_bounds = array<i64: 128, 128>}, {pipeline_mode = #tpu.pipeline_mode<synchronous>, transform_indices = @transform_5, window_bounds = array<i64: 1, 128>}, {transform_indices = @transform_6, window_bounds = array<i64: 128, 128>}]} {
    %c0_i32 = arith.constant 0 : i32
    %0 = arith.cmpi eq, %arg1, %c0_i32 : i32
    %1 = arith.extui %0 : i1 to i32
    %c0_i32_0 = arith.constant 0 : i32
    %2 = arith.cmpi ne, %1, %c0_i32_0 : i32
    scf.if %2 {
      %cst_11 = arith.constant 0.000000e+00 : f32
      %16 = vector.broadcast %cst_11 : f32 to vector<128x128xf32>
      %c0_12 = arith.constant 0 : index
      %c0_13 = arith.constant 0 : index
      %17 = vector.load %arg9[%c0_12, %c0_13] : memref<128x128xf32, #tpu.memory_space<vmem>>, vector<128x128xf32>
      tpu.vector_store %arg9[%c0_12, %c0_13], %16 {strides = array<i32>} : memref<128x128xf32, #tpu.memory_space<vmem>>, vector<128x128xf32>,
    } else {
    }
    %c0 = arith.constant 0 : index
    %c0_1 = arith.constant 0 : index
    %3 = vector.load %arg3[%c0, %c0_1] : memref<128x128xf32, #tpu.memory_space<vmem>>, vector<128x128xf32>
    %c0_2 = arith.constant 0 : index
    %c0_3 = arith.constant 0 : index
    %4 = vector.load %arg4[%c0_2, %c0_3] : memref<128x1xf32, #tpu.memory_space<vmem>>, vector<128x1xf32>
    %5 = vector.broadcast %4 : vector<128x1xf32> to vector<128x128xf32>
    %6 = arith.mulf %3, %5 : vector<128x128xf32>
    %7 = arith.truncf %6 : vector<128x128xf32> to vector<128x128xbf16>
    %c0_4 = arith.constant 0 : index
    %c0_5 = arith.constant 0 : index
    %8 = vector.load %arg9[%c0_4, %c0_5] : memref<128x128xf32, #tpu.memory_space<vmem>>, vector<128x128xf32>
    %c0_6 = arith.constant 0 : index
    %c0_7 = arith.constant 0 : index
    %9 = vector.load %arg2[%c0_6, %c0_7] : memref<128x128xbf16, #tpu.memory_space<vmem>>, vector<128x128xbf16>
    %cst = arith.constant dense<0.000000e+00> : vector<128x128xf32>
    %10 = tpu.matmul %9, %7, %cst {dimension_numbers = #tpu.dot_dimension_numbers<[1], [0], [0], [1], [0, 0, 1, 1], [], []>} : vector<128x128xbf16>, vector<128x128xbf16>, vector<128x128xf32> -> vector<128x128xf32>
    %11 = arith.addf %8, %10 : vector<128x128xf32>
    %c0_8 = arith.constant 0 : index
    %c0_9 = arith.constant 0 : index
    %12 = vector.load %arg9[%c0_8, %c0_9] : memref<128x128xf32, #tpu.memory_space<vmem>>, vector<128x128xf32>
    tpu.vector_store %arg9[%c0_8, %c0_9], %11 {strides = array<i32>} : memref<128x128xf32, #tpu.memory_space<vmem>>, vector<128x128xf32>,
    %c3_i32 = arith.constant 3 : i32
    %13 = arith.cmpi eq, %arg1, %c3_i32 : i32
    %14 = arith.extui %13 : i1 to i32
    %c0_i32_10 = arith.constant 0 : i32
    %15 = arith.cmpi ne, %14, %c0_i32_10 : i32
    scf.if %15 {
      %c0_11 = arith.constant 0 : index
      %c0_12 = arith.constant 0 : index
      %16 = vector.load %arg9[%c0_11, %c0_12] : memref<128x128xf32, #tpu.memory_space<vmem>>, vector<128x128xf32>
      %c0_13 = arith.constant 0 : index
      %c0_14 = arith.constant 0 : index
      %17 = vector.load %arg5[%c0_13, %c0_14] : memref<128x1xf32, #tpu.memory_space<vmem>>, vector<128x1xf32>
      %18 = vector.broadcast %17 : vector<128x1xf32> to vector<128x128xf32>
      %19 = arith.mulf %16, %18 : vector<128x128xf32>
      %20 = arith.truncf %19 : vector<128x128xf32> to vector<128x128xbf16>
      %c0_15 = arith.constant 0 : index
      %c0_16 = arith.constant 0 : index
      %21 = vector.load %arg6[%c0_15, %c0_16] : memref<128x128xbf16, #tpu.memory_space<vmem>>, vector<128x128xbf16>
      %cst_17 = arith.constant dense<0.000000e+00> : vector<128x128xf32>
      %22 = tpu.matmul %20, %21, %cst_17 {dimension_numbers = #tpu.dot_dimension_numbers<[1], [0], [0], [1], [0, 0, 1, 1], [], []>} : vector<128x128xbf16>, vector<128x128xbf16>, vector<128x128xf32> -> vector<128x128xf32>
      %c0_18 = arith.constant 0 : index
      %c0_19 = arith.constant 0 : index
      %23 = vector.load %arg7[%c0_18, %c0_19] : memref<1x128xf32, #tpu.memory_space<vmem>>, vector<1x128xf32>
      %24 = vector.broadcast %23 : vector<1x128xf32> to vector<128x128xf32>
      %25 = arith.addf %22, %24 : vector<128x128xf32>
      %cst_20 = arith.constant 0.000000e+00 : f32
      %26 = vector.broadcast %cst_20 : f32 to vector<128x128xf32>
      %27 = arith.maximumf %25, %26 : vector<128x128xf32>
      %28 = arith.truncf %27 : vector<128x128xf32> to vector<128x128xbf16>
      %c0_21 = arith.constant 0 : index
      %c0_22 = arith.constant 0 : index
      %29 = vector.load %arg8[%c0_21, %c0_22] : memref<128x128xbf16, #tpu.memory_space<vmem>>, vector<128x128xbf16>
      tpu.vector_store %arg8[%c0_21, %c0_22], %28 {strides = array<i32>} : memref<128x128xbf16, #tpu.memory_space<vmem>>, vector<128x128xbf16>,
    } else {
    }
    return
  }
  func.func @transform_0(%arg0: i32, %arg1: i32) -> (i32, i32) {
    %c0_i32 = arith.constant 0 : i32
    return %arg0, %arg1 : i32, i32
  }
  func.func @transform_1(%arg0: i32, %arg1: i32) -> (i32, i32) {
    %c0_i32 = arith.constant 0 : i32
    %c0_i32_0 = arith.constant 0 : i32
    return %arg1, %c0_i32 : i32, i32
  }
  func.func @transform_2(%arg0: i32, %arg1: i32) -> (i32, i32) {
    %c0_i32 = arith.constant 0 : i32
    %c0_i32_0 = arith.constant 0 : i32
    return %arg1, %c0_i32 : i32, i32
  }
  func.func @transform_3(%arg0: i32, %arg1: i32) -> (i32, i32) {
    %c0_i32 = arith.constant 0 : i32
    %c0_i32_0 = arith.constant 0 : i32
    return %arg0, %c0_i32 : i32, i32
  }
  func.func @transform_4(%arg0: i32, %arg1: i32) -> (i32, i32) {
    %c0_i32 = arith.constant 0 : i32
    %c0_i32_0 = arith.constant 0 : i32
    %c0_i32_1 = arith.constant 0 : i32
    return %c0_i32, %c0_i32_0 : i32, i32
  }
  func.func @transform_5(%arg0: i32, %arg1: i32) -> (i32, i32) {
    %c0_i32 = arith.constant 0 : i32
    %c0_i32_0 = arith.constant 0 : i32
    %c0_i32_1 = arith.constant 0 : i32
    return %c0_i32, %c0_i32_0 : i32, i32
  }
  func.func @transform_6(%arg0: i32, %arg1: i32) -> (i32, i32) {
    %c0_i32 = arith.constant 0 : i32
    %c0_i32_0 = arith.constant 0 : i32
    return %arg0, %c0_i32 : i32, i32
  }
}

module attributes {stable_mosaic.version = 11 : i64} {
  func.func @_transform_first_kernel(%arg0: i32, %arg1: i32, %arg2: memref<128x128xbf16, #tpu.memory_space<vmem>>, %arg3: memref<128x128xbf16, #tpu.memory_space<vmem>>, %arg4: memref<128x128xbf16, #tpu.memory_space<vmem>>, %arg5: memref<128x1xf32, #tpu.memory_space<vmem>>, %arg6: memref<128x1xf32, #tpu.memory_space<vmem>>, %arg7: memref<1x128xf32, #tpu.memory_space<vmem>>, %arg8: memref<128x128xf32, #tpu.memory_space<vmem>>) attributes {dimension_semantics = [#tpu.dimension_semantics<parallel>, #tpu.dimension_semantics<arbitrary>], iteration_bounds = array<i64: 2, 3>, scalar_prefetch = 0 : i64, scratch_operands = 0 : i64, tpu.core_type = #tpu.core_type<tc>, window_params = [{transform_indices = @transform_0, window_bounds = array<i64: 128, 128>}, {transform_indices = @transform_1, window_bounds = array<i64: 128, 128>}, {pipeline_mode = #tpu.pipeline_mode<synchronous>, transform_indices = @transform_2, window_bounds = array<i64: 128, 128>}, {transform_indices = @transform_3, window_bounds = array<i64: 128, 1>}, {transform_indices = @transform_4, window_bounds = array<i64: 128, 1>}, {pipeline_mode = #tpu.pipeline_mode<synchronous>, transform_indices = @transform_5, window_bounds = array<i64: 1, 128>}, {transform_indices = @transform_6, window_bounds = array<i64: 128, 128>}]} {
    %c0_i32 = arith.constant 0 : i32
    %0 = arith.cmpi eq, %arg1, %c0_i32 : i32
    %1 = arith.extui %0 : i1 to i32
    %c0_i32_0 = arith.constant 0 : i32
    %2 = arith.cmpi ne, %1, %c0_i32_0 : i32
    scf.if %2 {
      %cst_14 = arith.constant 0.000000e+00 : f32
      %18 = vector.broadcast %cst_14 : f32 to vector<128x128xf32>
      %c0_15 = arith.constant 0 : index
      %c0_16 = arith.constant 0 : index
      %19 = vector.load %arg8[%c0_15, %c0_16] : memref<128x128xf32, #tpu.memory_space<vmem>>, vector<128x128xf32>
      tpu.vector_store %arg8[%c0_15, %c0_16], %18 {strides = array<i32>} : memref<128x128xf32, #tpu.memory_space<vmem>>, vector<128x128xf32>,
    } else {
    }
    %c0 = arith.constant 0 : index
    %c0_1 = arith.constant 0 : index
    %3 = vector.load %arg3[%c0, %c0_1] : memref<128x128xbf16, #tpu.memory_space<vmem>>, vector<128x128xbf16>
    %c0_2 = arith.constant 0 : index
    %c0_3 = arith.constant 0 : index
    %4 = vector.load %arg4[%c0_2, %c0_3] : memref<128x128xbf16, #tpu.memory_space<vmem>>, vector<128x128xbf16>
    %cst = arith.constant dense<0.000000e+00> : vector<128x128xf32>
    %5 = tpu.matmul %3, %4, %cst {dimension_numbers = #tpu.dot_dimension_numbers<[1], [0], [0], [1], [0, 0, 1, 1], [], []>} : vector<128x128xbf16>, vector<128x128xbf16>, vector<128x128xf32> -> vector<128x128xf32>
    %c0_4 = arith.constant 0 : index
    %c0_5 = arith.constant 0 : index
    %6 = vector.load %arg5[%c0_4, %c0_5] : memref<128x1xf32, #tpu.memory_space<vmem>>, vector<128x1xf32>
    %7 = vector.broadcast %6 : vector<128x1xf32> to vector<128x128xf32>
    %8 = arith.mulf %5, %7 : vector<128x128xf32>
    %9 = arith.truncf %8 : vector<128x128xf32> to vector<128x128xbf16>
    %c0_6 = arith.constant 0 : index
    %c0_7 = arith.constant 0 : index
    %10 = vector.load %arg8[%c0_6, %c0_7] : memref<128x128xf32, #tpu.memory_space<vmem>>, vector<128x128xf32>
    %c0_8 = arith.constant 0 : index
    %c0_9 = arith.constant 0 : index
    %11 = vector.load %arg2[%c0_8, %c0_9] : memref<128x128xbf16, #tpu.memory_space<vmem>>, vector<128x128xbf16>
    %cst_10 = arith.constant dense<0.000000e+00> : vector<128x128xf32>
    %12 = tpu.matmul %11, %9, %cst_10 {dimension_numbers = #tpu.dot_dimension_numbers<[1], [0], [0], [1], [0, 0, 1, 1], [], []>} : vector<128x128xbf16>, vector<128x128xbf16>, vector<128x128xf32> -> vector<128x128xf32>
    %13 = arith.addf %10, %12 : vector<128x128xf32>
    %c0_11 = arith.constant 0 : index
    %c0_12 = arith.constant 0 : index
    %14 = vector.load %arg8[%c0_11, %c0_12] : memref<128x128xf32, #tpu.memory_space<vmem>>, vector<128x128xf32>
    tpu.vector_store %arg8[%c0_11, %c0_12], %13 {strides = array<i32>} : memref<128x128xf32, #tpu.memory_space<vmem>>, vector<128x128xf32>,
    %c2_i32 = arith.constant 2 : i32
    %15 = arith.cmpi eq, %arg1, %c2_i32 : i32
    %16 = arith.extui %15 : i1 to i32
    %c0_i32_13 = arith.constant 0 : i32
    %17 = arith.cmpi ne, %16, %c0_i32_13 : i32
    scf.if %17 {
      %c0_14 = arith.constant 0 : index
      %c0_15 = arith.constant 0 : index
      %18 = vector.load %arg8[%c0_14, %c0_15] : memref<128x128xf32, #tpu.memory_space<vmem>>, vector<128x128xf32>
      %c0_16 = arith.constant 0 : index
      %c0_17 = arith.constant 0 : index
      %19 = vector.load %arg6[%c0_16, %c0_17] : memref<128x1xf32, #tpu.memory_space<vmem>>, vector<128x1xf32>
      %20 = vector.broadcast %19 : vector<128x1xf32> to vector<128x128xf32>
      %21 = arith.mulf %18, %20 : vector<128x128xf32>
      %c0_18 = arith.constant 0 : index
      %c0_19 = arith.constant 0 : index
      %22 = vector.load %arg7[%c0_18, %c0_19] : memref<1x128xf32, #tpu.memory_space<vmem>>, vector<1x128xf32>
      %23 = vector.broadcast %22 : vector<1x128xf32> to vector<128x128xf32>
      %24 = arith.addf %21, %23 : vector<128x128xf32>
      %cst_20 = arith.constant 0.000000e+00 : f32
      %25 = vector.broadcast %cst_20 : f32 to vector<128x128xf32>
      %26 = arith.maximumf %24, %25 : vector<128x128xf32>
      %c0_21 = arith.constant 0 : index
      %c0_22 = arith.constant 0 : index
      %27 = vector.load %arg8[%c0_21, %c0_22] : memref<128x128xf32, #tpu.memory_space<vmem>>, vector<128x128xf32>
      tpu.vector_store %arg8[%c0_21, %c0_22], %26 {strides = array<i32>} : memref<128x128xf32, #tpu.memory_space<vmem>>, vector<128x128xf32>,
    } else {
    }
    return
  }
  func.func @transform_0(%arg0: i32, %arg1: i32) -> (i32, i32) {
    %c0_i32 = arith.constant 0 : i32
    return %arg0, %arg1 : i32, i32
  }
  func.func @transform_1(%arg0: i32, %arg1: i32) -> (i32, i32) {
    %c0_i32 = arith.constant 0 : i32
    %c0_i32_0 = arith.constant 0 : i32
    return %arg1, %c0_i32 : i32, i32
  }
  func.func @transform_2(%arg0: i32, %arg1: i32) -> (i32, i32) {
    %c0_i32 = arith.constant 0 : i32
    %c0_i32_0 = arith.constant 0 : i32
    %c0_i32_1 = arith.constant 0 : i32
    return %c0_i32, %c0_i32_0 : i32, i32
  }
  func.func @transform_3(%arg0: i32, %arg1: i32) -> (i32, i32) {
    %c0_i32 = arith.constant 0 : i32
    %c0_i32_0 = arith.constant 0 : i32
    return %arg1, %c0_i32 : i32, i32
  }
  func.func @transform_4(%arg0: i32, %arg1: i32) -> (i32, i32) {
    %c0_i32 = arith.constant 0 : i32
    %c0_i32_0 = arith.constant 0 : i32
    return %arg0, %c0_i32 : i32, i32
  }
  func.func @transform_5(%arg0: i32, %arg1: i32) -> (i32, i32) {
    %c0_i32 = arith.constant 0 : i32
    %c0_i32_0 = arith.constant 0 : i32
    %c0_i32_1 = arith.constant 0 : i32
    return %c0_i32, %c0_i32_0 : i32, i32
  }
  func.func @transform_6(%arg0: i32, %arg1: i32) -> (i32, i32) {
    %c0_i32 = arith.constant 0 : i32
    %c0_i32_0 = arith.constant 0 : i32
    return %arg0, %c0_i32 : i32, i32
  }
}

</mosaic_0001>

<llo_original>
// kernel: stochastic_two_layer_rgcn.3
$region0: #{stochastic_two_layer_rgcn.3}
  #allocation0 [shape = 'u32[]', space=smem, size = 0x4, offset = 0x4, fixed_abs, tag = 'smem constant byte address 0x4 - core index']
  #allocation1 [shape = 'u32[144,128]{1,0:T(1,128)}', space=vmem, size = 0x12000, scoped, tag = 'internal scratch']
  %s0 = inlined_call_operand.vmem [shape: bf16[256,384], index: 0, kind: input, shape index: {}]
  %s1 = inlined_call_operand.vmem [shape: bf16[384,128], index: 1, kind: input, shape index: {}]
  %s2 = inlined_call_operand.vmem [shape: bf16[128,128], index: 2, kind: input, shape index: {}]
  %s3 = inlined_call_operand.vmem [shape: f32[384,1], index: 3, kind: input, shape index: {}]
  %s4 = inlined_call_operand.vmem [shape: f32[256,1], index: 4, kind: input, shape index: {}]
  %s5 = inlined_call_operand.vmem [shape: f32[1,128], index: 5, kind: input, shape index: {}]
  %s6 = inlined_call_operand.vmem [shape: f32[256,128], index: 6, kind: output, shape index: {}]
  %s7 = sld [smem:[#allocation0]]
  $region106: #{stochastic_two_layer_rgcn.3} parent=0
    _
  %s9 = ssub.s32 1, %s7
  %s10 = scalar_select 0, %s9, %s7
  $region1: #{stochastic_two_layer_rgcn.3} parent=0
    #allocation2 [shape = 'u8[65536]{0}', space=vmem, size = 0x10000, scoped, tag = 'input window, operand 0']
    loop: start=0, step=1, limit=8
    $region2: #{stochastic_two_layer_rgcn.3} parent=1 // loop_pre_header
      _
    $region3: #{stochastic_two_layer_rgcn.3} parent=1 // loop_header
      %s12 = sphi 0, %s16
      %p13 = scmp.ge.s32.totalorder %s12, 8
      %s19 = sphi 0, %s31
      %s20 = sphi 0, %s27
      %s21 = sphi 0, %s19
      %s22 = sphi 0, %s20
      %s23 = sphi 0, %s21
      %s24 = sphi 0, %s22
      %s36 = sphi 0, %s38
      %s39 = sphi 0, %s36
      %s40 = sphi 0, %s39
      %s56 = sphi 0, %s40
      %s62 = sphi 0, %s64
      %s65 = sphi 0, %s62
      %s66 = sphi 0, %s65
      %s82 = sphi 0, %s66
      %s86 = sphi 0, %s86
      %s88 = sphi 0, %s86
      %s89 = sphi 0, %s88
      %s103 = sphi 0, %s89
      %s109 = sphi 0, %s111
      %s112 = sphi 0, %s109
      %s113 = sphi 0, %s112
      %s129 = sphi 0, %s113
      %s135 = sphi 0, %s137
      %s138 = sphi 0, %s135
      %s139 = sphi 0, %s138
      %s155 = sphi 0, %s139
      %s159 = sphi 0, %s159
      %s161 = sphi 0, %s159
      %s162 = sphi 0, %s161
      %s176 = sphi 0, %s162
      %s182 = sphi 0, %s184
      %s185 = sphi 0, %s182
      %s186 = sphi 0, %s185
      %s202 = sphi 0, %s186
    $region4: #{stochastic_two_layer_rgcn.3} parent=1 // loop_header_branch
      %15 = sbr.rel (%p13) target = $region8
    $region5: #{stochastic_two_layer_rgcn.3} parent=1 // loop_body
      %s17 = ssub.s32 %s12, 1
      %s18 = ssub.s32 %s12, 2
      %s25 = sadd.s32 1, %s20
      %p26 = scmp.ge.s32.totalorder %s25, 3
      %s27 = scalar_select %p26, 0, %s25
      %s28 = sadd.s32 1, %s19
      %s29 = scalar_select %p26, %s28, %s19
      %p30 = scmp.ge.s32.totalorder %s29, 2
      %s31 = scalar_select %p30, 0, %s29
      %s32 = ssub.s32 %s19, %s31
      %s33 = ssub.s32 %s20, %s27
      %s34 = sor.u32 %s32, %s33
      %p35 = scmp.eq.s32.totalorder %s34, 0
      %s37 = sadd.s32 %s36, 1
      %s38 = scalar_select %p35, %s36, %s37
      %p41 = pneg %p35
      %p42 = scmp.eq.s32.totalorder %s12, 5
      %p43 = por %p41, %p42
      %p44 = scmp.ne.s32.totalorder %s36, %s39
      %p45 = scmp.eq.s32.totalorder %s12, 0
      %p46 = por %p44, %p45
      %p47 = scmp.ne.s32.totalorder %s36, %s39
      %p48 = scmp.eq.s32.totalorder %s17, 5
      %p49 = por %p47, %p48
      %p50 = scmp.ne.s32.totalorder %s39, %s40
      %p51 = scmp.eq.s32.totalorder %s17, 0
      %p52 = por %p50, %p51
      %p53 = scmp.ne.s32.totalorder %s39, %s40
      %p54 = scmp.eq.s32.totalorder %s18, 5
      %p55 = por %p53, %p54
      %p57 = scmp.ne.s32.totalorder %s40, %s56
      %p58 = scmp.eq.s32.totalorder %s18, 0
      %p59 = por %p57, %p58
      %s60 = ssub.s32 %s20, %s27
      %p61 = scmp.eq.s32.totalorder %s60, 0
      %s63 = sadd.s32 %s62, 1
      %s64 = scalar_select %p61, %s62, %s63
      %p67 = pneg %p61
      %p68 = scmp.eq.s32.totalorder %s12, 5
      %p69 = por %p67, %p68
      %p70 = scmp.ne.s32.totalorder %s62, %s65
      %p71 = scmp.eq.s32.totalorder %s12, 0
      %p72 = por %p70, %p71
      %p73 = scmp.ne.s32.totalorder %s62, %s65
      %p74 = scmp.eq.s32.totalorder %s17, 5
      %p75 = por %p73, %p74
      %p76 = scmp.ne.s32.totalorder %s65, %s66
      %p77 = scmp.eq.s32.totalorder %s17, 0
      %p78 = por %p76, %p77
      %p79 = scmp.ne.s32.totalorder %s65, %s66
      %p80 = scmp.eq.s32.totalorder %s18, 5
      %p81 = por %p79, %p80
      %p83 = scmp.ne.s32.totalorder %s66, %s82
      %p84 = scmp.eq.s32.totalorder %s18, 0
      %p85 = por %p83, %p84
      %s87 = sadd.s32 %s86, 1
      %p90 = scmp.eq.s32.totalorder %s12, 5
      %p91 = scmp.ne.s32.totalorder %s86, %s88
      %p92 = scmp.eq.s32.totalorder %s12, 0
      %p93 = por %p91, %p92
      %p94 = scmp.ne.s32.totalorder %s86, %s88
      %p95 = scmp.eq.s32.totalorder %s17, 5
      %p96 = por %p94, %p95
      %p97 = scmp.ne.s32.totalorder %s88, %s89
      %p98 = scmp.eq.s32.totalorder %s17, 0
      %p99 = por %p97, %p98
      %p100 = scmp.ne.s32.totalorder %s88, %s89
      %p101 = scmp.eq.s32.totalorder %s18, 5
      %p102 = por %p100, %p101
      %p104 = scmp.ne.s32.totalorder %s89, %s103
      %p105 = scmp.eq.s32.totalorder %s18, 0
      %p106 = por %p104, %p105
      %s107 = ssub.s32 %s20, %s27
      %p108 = scmp.eq.s32.totalorder %s107, 0
      %s110 = sadd.s32 %s109, 1
      %s111 = scalar_select %p108, %s109, %s110
      %p114 = pneg %p108
      %p115 = scmp.eq.s32.totalorder %s12, 5
      %p116 = por %p114, %p115
      %p117 = scmp.ne.s32.totalorder %s109, %s112
      %p118 = scmp.eq.s32.totalorder %s12, 0
      %p119 = por %p117, %p118
      %p120 = scmp.ne.s32.totalorder %s109, %s112
      %p121 = scmp.eq.s32.totalorder %s17, 5
      %p122 = por %p120, %p121
      %p123 = scmp.ne.s32.totalorder %s112, %s113
      %p124 = scmp.eq.s32.totalorder %s17, 0
      %p125 = por %p123, %p124
      %p126 = scmp.ne.s32.totalorder %s112, %s113
      %p127 = scmp.eq.s32.totalorder %s18, 5
      %p128 = por %p126, %p127
      %p130 = scmp.ne.s32.totalorder %s113, %s129
      %p131 = scmp.eq.s32.totalorder %s18, 0
      %p132 = por %p130, %p131
      %s133 = ssub.s32 %s19, %s31
      %p134 = scmp.eq.s32.totalorder %s133, 0
      %s136 = sadd.s32 %s135, 1
      %s137 = scalar_select %p134, %s135, %s136
      %p140 = pneg %p134
      %p141 = scmp.eq.s32.totalorder %s12, 5
      %p142 = por %p140, %p141
      %p143 = scmp.ne.s32.totalorder %s135, %s138
      %p144 = scmp.eq.s32.totalorder %s12, 0
      %p145 = por %p143, %p144
      %p146 = scmp.ne.s32.totalorder %s135, %s138
      %p147 = scmp.eq.s32.totalorder %s17, 5
      %p148 = por %p146, %p147
      %p149 = scmp.ne.s32.totalorder %s138, %s139
      %p150 = scmp.eq.s32.totalorder %s17, 0
      %p151 = por %p149, %p150
      %p152 = scmp.ne.s32.totalorder %s138, %s139
      %p153 = scmp.eq.s32.totalorder %s18, 5
      %p154 = por %p152, %p153
      %p156 = scmp.ne.s32.totalorder %s139, %s155
      %p157 = scmp.eq.s32.totalorder %s18, 0
      %p158 = por %p156, %p157
      %s160 = sadd.s32 %s159, 1
      %p163 = scmp.eq.s32.totalorder %s12, 5
      %p164 = scmp.ne.s32.totalorder %s159, %s161
      %p165 = scmp.eq.s32.totalorder %s12, 0
      %p166 = por %p164, %p165
      %p167 = scmp.ne.s32.totalorder %s159, %s161
      %p168 = scmp.eq.s32.totalorder %s17, 5
      %p169 = por %p167, %p168
      %p170 = scmp.ne.s32.totalorder %s161, %s162
      %p171 = scmp.eq.s32.totalorder %s17, 0
      %p172 = por %p170, %p171
      %p173 = scmp.ne.s32.totalorder %s161, %s162
      %p174 = scmp.eq.s32.totalorder %s18, 5
      %p175 = por %p173, %p174
      %p177 = scmp.ne.s32.totalorder %s162, %s176
      %p178 = scmp.eq.s32.totalorder %s18, 0
      %p179 = por %p177, %p178
      %s180 = ssub.s32 %s19, %s31
      %p181 = scmp.eq.s32.totalorder %s180, 0
      %s183 = sadd.s32 %s182, 1
      %s184 = scalar_select %p181, %s182, %s183
      %p187 = pneg %p181
      %p188 = scmp.eq.s32.totalorder %s12, 5
      %p189 = por %p187, %p188
      %p190 = scmp.ne.s32.totalorder %s182, %s185
      %p191 = scmp.eq.s32.totalorder %s12, 0
      %p192 = por %p190, %p191
      %p193 = scmp.ne.s32.totalorder %s182, %s185
      %p194 = scmp.eq.s32.totalorder %s17, 5
      %p195 = por %p193, %p194
      %p196 = scmp.ne.s32.totalorder %s185, %s186
      %p197 = scmp.eq.s32.totalorder %s17, 0
      %p198 = por %p196, %p197
      %p199 = scmp.ne.s32.totalorder %s185, %s186
      %p200 = scmp.eq.s32.totalorder %s18, 5
      %p201 = por %p199, %p200
      %p203 = scmp.ne.s32.totalorder %s186, %s202
      %p204 = scmp.eq.s32.totalorder %s18, 0
      %p205 = por %p203, %p204
      %p206 = scmp.le.s32.totalorder 1, %s12
      %p207 = scmp.lt.s32.totalorder %s12, 7
      %p208 = pnand %p206, %p207
      %p209 = pneg %p208
      // Predicated region
      $region9: #{stochastic_two_layer_rgcn.3} parent=5 // pred_check
        _
      $region10: #{stochastic_two_layer_rgcn.3} parent=5 // pred_check_branch
        %211 = sbr.rel (%p208) target = $region12
      $region11: #{stochastic_two_layer_rgcn.3} parent=5 // pred_region
        %s212 = ssub.s32 %s12, 1
        // Predicated region
        $region13: #{stochastic_two_layer_rgcn.3} parent=11 // pred_check
          %p213 = pneg %p99
        $region14: #{stochastic_two_layer_rgcn.3} parent=11 // pred_check_branch
          %215 = sbr.rel (%p213) target = $region16
        $region15: #{stochastic_two_layer_rgcn.3} parent=11 // pred_region
          _
        $region16: #{stochastic_two_layer_rgcn.3} parent=11 // pred_fallthru
          _
        // Predicated region
        $region17: #{stochastic_two_layer_rgcn.3} parent=11 // pred_check
          %p216 = pneg %p172
        $region18: #{stochastic_two_layer_rgcn.3} parent=11 // pred_check_branch
          %218 = sbr.rel (%p216) target = $region20
        $region19: #{stochastic_two_layer_rgcn.3} parent=11 // pred_region
          _
        $region20: #{stochastic_two_layer_rgcn.3} parent=11 // pred_fallthru
          _
      $region12: #{stochastic_two_layer_rgcn.3} parent=5 // pred_fallthru
        _
      %p219 = scmp.lt.s32.totalorder %s12, 6
      // Predicated region
      $region21: #{stochastic_two_layer_rgcn.3} parent=5 // pred_check
        %p220 = pneg %p219
      $region22: #{stochastic_two_layer_rgcn.3} parent=5 // pred_check_branch
        %222 = sbr.rel (%p220) target = $region24
      $region23: #{stochastic_two_layer_rgcn.3} parent=5 // pred_region
        // Predicated region
        $region25: #{stochastic_two_layer_rgcn.3} parent=23 // pred_check
          %p223 = pneg %p46
        $region26: #{stochastic_two_layer_rgcn.3} parent=23 // pred_check_branch
          %225 = sbr.rel (%p223) target = $region28
        $region27: #{stochastic_two_layer_rgcn.3} parent=23 // pred_region
          %s226 = sand.u32 %s36, 1
          %s227 = sand.u32 %s36, 1
          %s228 = smul.addr %s227, 64
          %s229 = scalar_lea.vmem [#allocation2], %s228
          %s230 = smul.u32 16, %s19
          %s231 = smul.addr %s230, 3
          %s232 = sadd.s32 %s20, %s231
          %s233 = smul.addr %s232, 4
          %s234 = scalar_lea.vmem %s0, %s233
          // Predicated region
          $region29: #{stochastic_two_layer_rgcn.3} parent=27 // pred_check
            _
          $region30: #{stochastic_two_layer_rgcn.3} parent=27 // pred_check_branch
            %236 = sbr.rel (0) target = $region32
          $region31: #{stochastic_two_layer_rgcn.3} parent=27 // pred_region
            // Predicated region
            $region33: #{stochastic_two_layer_rgcn.3} parent=31 // pred_check
              _
            $region34: #{stochastic_two_layer_rgcn.3} parent=31 // pred_check_branch
              %238 = sbr.rel target = $region36
            $region35: #{stochastic_two_layer_rgcn.3} parent=31 // pred_region
              // Predicated region
              $region48: #{stochastic_two_layer_rgcn.3} parent=35 // pred_check
                _
              $region49: #{stochastic_two_layer_rgcn.3} parent=35 // pred_check_branch
                %284 = sbr.rel (0) target = $region51
              $region50: #{stochastic_two_layer_rgcn.3} parent=35 // pred_region
                loop: start=0, step=1, limit=1
                $region52: #{stochastic_two_layer_rgcn.3} parent=50 // loop_pre_header
                  _
                $region53: #{stochastic_two_layer_rgcn.3} parent=50 // loop_header
                  %s286 = sphi 0, %s290
                  %p287 = scmp.ge.s32.totalorder %s286, 1
                  %s291 = sphi %s234, %s234
                  %s292 = sphi %s229, %s229
                $region54: #{stochastic_two_layer_rgcn.3} parent=50 // loop_header_branch
                  %289 = sbr.rel (%p287) target = $region58
                $region55: #{stochastic_two_layer_rgcn.3} parent=50 // loop_body
                  _
                $region56: #{stochastic_two_layer_rgcn.3} parent=50 // loop_footer
                  %s290 = sadd.s32 1, %s286
                $region57: #{stochastic_two_layer_rgcn.3} parent=50 // loop_footer_branch
                  %285 = sbr.rel target = $region53
                $region58: #{stochastic_two_layer_rgcn.3} parent=50 // loop_exit
                  _
                %s294 = ssub.s32 16, 1
                loop: start=0, step=1, limit=1
                $region59: #{stochastic_two_layer_rgcn.3} parent=50 // loop_pre_header
                  _
                $region60: #{stochastic_two_layer_rgcn.3} parent=50 // loop_header
                  %s296 = sphi 0, %s300
                  %p297 = scmp.ge.s32.totalorder %s296, 1
                  %s301 = sphi %s234, %s234
                  %s302 = sphi %s229, %s229
                $region61: #{stochastic_two_layer_rgcn.3} parent=50 // loop_header_branch
                  %299 = sbr.rel (%p297) target = $region65
                $region62: #{stochastic_two_layer_rgcn.3} parent=50 // loop_body
                  %v303 = vld [vmem:[%s301] sm:%s294]
                  %304 = vst [vmem:[%s302] sm:%s294] %v303
                  %v305 = vld [vmem:[%s301 + $0xc] sm:%s294]
                  %306 = vst [vmem:[%s302 + $0x4] sm:%s294] %v305
                  %v307 = vld [vmem:[%s301 + $0x18] sm:%s294]
                  %308 = vst [vmem:[%s302 + $0x8] sm:%s294] %v307
                  %v309 = vld [vmem:[%s301 + $0x24] sm:%s294]
                  %310 = vst [vmem:[%s302 + $0xc] sm:%s294] %v309
                  %v311 = vld [vmem:[%s301 + $0x30] sm:%s294]
                  %312 = vst [vmem:[%s302 + $0x10] sm:%s294] %v311
                  %v313 = vld [vmem:[%s301 + $0x3c] sm:%s294]
                  %314 = vst [vmem:[%s302 + $0x14] sm:%s294] %v313
                  %v315 = vld [vmem:[%s301 + $0x48] sm:%s294]
                  %316 = vst [vmem:[%s302 + $0x18] sm:%s294] %v315
                  %v317 = vld [vmem:[%s301 + $0x54] sm:%s294]
                  %318 = vst [vmem:[%s302 + $0x1c] sm:%s294] %v317
                  %v319 = vld [vmem:[%s301 + $0x60] sm:%s294]
                  %320 = vst [vmem:[%s302 + $0x20] sm:%s294] %v319
                  %v321 = vld [vmem:[%s301 + $0x6c] sm:%s294]
                  %322 = vst [vmem:[%s302 + $0x24] sm:%s294] %v321
                  %v323 = vld [vmem:[%s301 + $0x78] sm:%s294]
                  %324 = vst [vmem:[%s302 + $0x28] sm:%s294] %v323
                  %v325 = vld [vmem:[%s301 + $0x84] sm:%s294]
                  %326 = vst [vmem:[%s302 + $0x2c] sm:%s294] %v325
                  %v327 = vld [vmem:[%s301 + $0x90] sm:%s294]
                  %328 = vst [vmem:[%s302 + $0x30] sm:%s294] %v327
                  %v329 = vld [vmem:[%s301 + $0x9c] sm:%s294]
                  %330 = vst [vmem:[%s302 + $0x34] sm:%s294] %v329
                  %v331 = vld [vmem:[%s301 + $0xa8] sm:%s294]
                  %332 = vst [vmem:[%s302 + $0x38] sm:%s294] %v331
                  %v333 = vld [vmem:[%s301 + $0xb4] sm:%s294]
                  %334 = vst [vmem:[%s302 + $0x3c] sm:%s294] %v333
                $region63: #{stochastic_two_layer_rgcn.3} parent=50 // loop_footer
                  %s300 = sadd.s32 1, %s296
                $region64: #{stochastic_two_layer_rgcn.3} parent=50 // loop_footer_branch
                  %295 = sbr.rel target = $region60
                $region65: #{stochastic_two_layer_rgcn.3} parent=50 // loop_exit
                  _
              $region51: #{stochastic_two_layer_rgcn.3} parent=35 // pred_fallthru
                _
            $region36: #{stochastic_two_layer_rgcn.3} parent=31 // pred_fallthru
              _
            // Predicated region
            $region37: #{stochastic_two_layer_rgcn.3} parent=31 // pred_check
              _
            $region38: #{stochastic_two_layer_rgcn.3} parent=31 // pred_check_branch
              %240 = sbr.rel (0) target = $region40
            $region39: #{stochastic_two_layer_rgcn.3} parent=31 // pred_region
              %s242 = ssub.s32 16, 1
              loop: start=0, step=1, limit=1
              $region41: #{stochastic_two_layer_rgcn.3} parent=39 // loop_pre_header
                _
              $region42: #{stochastic_two_layer_rgcn.3} parent=39 // loop_header
                %s244 = sphi 0, %s248
                %p245 = scmp.ge.s32.totalorder %s244, 1
                %s249 = sphi %s234, %s234
                %s250 = sphi %s229, %s229
              $region43: #{stochastic_two_layer_rgcn.3} parent=39 // loop_header_branch
                %247 = sbr.rel (%p245) target = $region47
              $region44: #{stochastic_two_layer_rgcn.3} parent=39 // loop_body
                %v251 = vld [vmem:[%s249] sm:%s242]
                %252 = vst [vmem:[%s250] sm:%s242] %v251
                %v253 = vld [vmem:[%s249 + $0xc] sm:%s242]
                %254 = vst [vmem:[%s250 + $0x4] sm:%s242] %v253
                %v255 = vld [vmem:[%s249 + $0x18] sm:%s242]
                %256 = vst [vmem:[%s250 + $0x8] sm:%s242] %v255
                %v257 = vld [vmem:[%s249 + $0x24] sm:%s242]
                %258 = vst [vmem:[%s250 + $0xc] sm:%s242] %v257
                %v259 = vld [vmem:[%s249 + $0x30] sm:%s242]
                %260 = vst [vmem:[%s250 + $0x10] sm:%s242] %v259
                %v261 = vld [vmem:[%s249 + $0x3c] sm:%s242]
                %262 = vst [vmem:[%s250 + $0x14] sm:%s242] %v261
                %v263 = vld [vmem:[%s249 + $0x48] sm:%s242]
                %264 = vst [vmem:[%s250 + $0x18] sm:%s242] %v263
                %v265 = vld [vmem:[%s249 + $0x54] sm:%s242]
                %266 = vst [vmem:[%s250 + $0x1c] sm:%s242] %v265
                %v267 = vld [vmem:[%s249 + $0x60] sm:%s242]
                %268 = vst [vmem:[%s250 + $0x20] sm:%s242] %v267
                %v269 = vld [vmem:[%s249 + $0x6c] sm:%s242]
                %270 = vst [vmem:[%s250 + $0x24] sm:%s242] %v269
                %v271 = vld [vmem:[%s249 + $0x78] sm:%s242]
                %272 = vst [vmem:[%s250 + $0x28] sm:%s242] %v271
                %v273 = vld [vmem:[%s249 + $0x84] sm:%s242]
                %274 = vst [vmem:[%s250 + $0x2c] sm:%s242] %v273
                %v275 = vld [vmem:[%s249 + $0x90] sm:%s242]
                %276 = vst [vmem:[%s250 + $0x30] sm:%s242] %v275
                %v277 = vld [vmem:[%s249 + $0x9c] sm:%s242]
                %278 = vst [vmem:[%s250 + $0x34] sm:%s242] %v277
                %v279 = vld [vmem:[%s249 + $0xa8] sm:%s242]
                %280 = vst [vmem:[%s250 + $0x38] sm:%s242] %v279
                %v281 = vld [vmem:[%s249 + $0xb4] sm:%s242]
                %282 = vst [vmem:[%s250 + $0x3c] sm:%s242] %v281
              $region45: #{stochastic_two_layer_rgcn.3} parent=39 // loop_footer
                %s248 = sadd.s32 1, %s244
              $region46: #{stochastic_two_layer_rgcn.3} parent=39 // loop_footer_branch
                %243 = sbr.rel target = $region42
              $region47: #{stochastic_two_layer_rgcn.3} parent=39 // loop_exit
                _
            $region40: #{stochastic_two_layer_rgcn.3} parent=31 // pred_fallthru
              _
          $region32: #{stochastic_two_layer_rgcn.3} parent=27 // pred_fallthru
            _
          %335 = vnop
        $region28: #{stochastic_two_layer_rgcn.3} parent=23 // pred_fallthru
          _
        // Predicated region
        $region66: #{stochastic_two_layer_rgcn.3} parent=23 // pred_check
          %p336 = pneg %p72
        $region67: #{stochastic_two_layer_rgcn.3} parent=23 // pred_check_branch
          %338 = sbr.rel (%p336) target = $region69
        $region68: #{stochastic_two_layer_rgcn.3} parent=23 // pred_region
          %s339 = smul.u32 16, %s20
          %p340 = scmp.lt.s32.totalorder %s339, 47
          %s341 = scalar_select %p340, %s339, 47
          %s342 = smul.addr %s341, 4
          %s343 = scalar_lea.vmem %s1, %s342
          %s344 = smul.u32 16, %s20
        $region69: #{stochastic_two_layer_rgcn.3} parent=23 // pred_fallthru
          _
        // Predicated region
        $region70: #{stochastic_two_layer_rgcn.3} parent=23 // pred_check
          %p345 = pneg %p119
        $region71: #{stochastic_two_layer_rgcn.3} parent=23 // pred_check_branch
          %347 = sbr.rel (%p345) target = $region73
        $region72: #{stochastic_two_layer_rgcn.3} parent=23 // pred_region
          %s348 = smul.u32 16, %s20
          %p349 = scmp.lt.s32.totalorder %s348, 47
          %s350 = scalar_select %p349, %s348, 47
          %s351 = smul.addr %s350, 8
          %s352 = scalar_lea.vmem %s3, %s351
          %s353 = smul.u32 16, %s20
        $region73: #{stochastic_two_layer_rgcn.3} parent=23 // pred_fallthru
          _
        // Predicated region
        $region74: #{stochastic_two_layer_rgcn.3} parent=23 // pred_check
          %p354 = pneg %p145
        $region75: #{stochastic_two_layer_rgcn.3} parent=23 // pred_check_branch
          %356 = sbr.rel (%p354) target = $region77
        $region76: #{stochastic_two_layer_rgcn.3} parent=23 // pred_region
          %s357 = smul.u32 16, %s19
          %p358 = scmp.lt.s32.totalorder %s357, 31
          %s359 = scalar_select %p358, %s357, 31
          %s360 = smul.addr %s359, 8
          %s361 = scalar_lea.vmem %s4, %s360
          %s362 = smul.u32 16, %s19
        $region77: #{stochastic_two_layer_rgcn.3} parent=23 // pred_fallthru
          _
      $region24: #{stochastic_two_layer_rgcn.3} parent=5 // pred_fallthru
        _
      %p363 = scmp.le.s32.totalorder 1, %s12
      %p364 = scmp.lt.s32.totalorder %s12, 7
      %p365 = pnand %p363, %p364
      %p366 = pneg %p365
      // Predicated region
      $region78: #{stochastic_two_layer_rgcn.3} parent=5 // pred_check
        _
      $region79: #{stochastic_two_layer_rgcn.3} parent=5 // pred_check_branch
        %368 = sbr.rel (%p365) target = $region81
      $region80: #{stochastic_two_layer_rgcn.3} parent=5 // pred_region
        %s369 = ssub.s32 %s12, 1
        %s370 = sand.u32 %s39, 1
        %s371 = sand.u32 %s39, 1
        %s372 = smul.addr %s371, 64
        %s373 = scalar_lea.vmem [#allocation2], %s372
        // Predicated region
        $region82: #{stochastic_two_layer_rgcn.3} parent=80 // pred_check
          %p374 = pneg %p52
        $region83: #{stochastic_two_layer_rgcn.3} parent=80 // pred_check_branch
          %376 = sbr.rel (%p374) target = $region85
        $region84: #{stochastic_two_layer_rgcn.3} parent=80 // pred_region
          _
        $region85: #{stochastic_two_layer_rgcn.3} parent=80 // pred_fallthru
          _
        %s377 = sand.u32 %s39, 1
        %s378 = sand.u32 %s39, 1
        %s379 = smul.addr %s378, 64
        %s380 = scalar_lea.vmem [#allocation2], %s379
        %p381 = pneg %p52
        %p382 = pneg %p49
        %s383 = smul.u32 16, %s22
        %p384 = scmp.lt.s32.totalorder %s383, 47
        %s385 = scalar_select %p384, %s383, 47
        %s386 = smul.addr %s385, 4
        %s387 = scalar_lea.vmem %s1, %s386
        %p388 = pneg %p78
        %p389 = pneg %p75
        %p390 = pneg %p99
        %p391 = pneg %p96
        %s392 = smul.u32 16, %s22
        %p393 = scmp.lt.s32.totalorder %s392, 47
        %s394 = scalar_select %p393, %s392, 47
        %s395 = smul.addr %s394, 8
        %s396 = scalar_lea.vmem %s3, %s395
        %p397 = pneg %p125
        %p398 = pneg %p122
        %s399 = smul.u32 16, %s21
        %p400 = scmp.lt.s32.totalorder %s399, 31
        %s401 = scalar_select %p400, %s399, 31
        %s402 = smul.addr %s401, 8
        %s403 = scalar_lea.vmem %s4, %s402
        %p404 = pneg %p151
        %p405 = pneg %p148
        %p406 = pneg %p172
        %p407 = pneg %p169
        %p408 = pneg %p198
        %p409 = pneg %p195
        %s410 = smul.u32 16, %s21
        %p411 = scmp.lt.s32.totalorder %s410, 31
        %s412 = scalar_select %p411, %s410, 31
        %s413 = smul.addr %s412, 8
        %s414 = scalar_lea.vmem %s6, %s413
        %s415 = smul.u32 16, %s21
        %s416 = smul.u32 16, %s22
        %p417 = scmp.lt.s32.totalorder %s416, 47
        %s418 = scalar_select %p417, %s416, 47
        %s419 = smul.addr %s418, 4
        %s420 = scalar_lea.vmem %s1, %s419
        %s421 = smul.u32 16, %s22
        %s422 = smul.u32 16, %s22
        %p423 = scmp.lt.s32.totalorder %s422, 47
        %s424 = scalar_select %p423, %s422, 47
        %s425 = smul.addr %s424, 8
        %s426 = scalar_lea.vmem %s3, %s425
        %s427 = smul.u32 16, %s22
        %s428 = smul.u32 16, %s21
        %p429 = scmp.lt.s32.totalorder %s428, 31
        %s430 = scalar_select %p429, %s428, 31
        %s431 = smul.addr %s430, 8
        %s432 = scalar_lea.vmem %s4, %s431
        %s433 = smul.u32 16, %s21
        %s434 = smul.u32 16, %s21
        %p435 = scmp.lt.s32.totalorder %s434, 31
        %s436 = scalar_select %p435, %s434, 31
        %s437 = smul.addr %s436, 8
        %s438 = scalar_lea.vmem %s6, %s437
        %s439 = smul.u32 16, %s21
        %p441 = scmp.eq.s32.totalorder %s22, 0
        // Predicated region
        $region86: #{stochastic_two_layer_rgcn.3} parent=80 // pred_check
          %p442 = pneg %p441
        $region87: #{stochastic_two_layer_rgcn.3} parent=80 // pred_check_branch
          %444 = sbr.rel (%p442) target = $region89
        $region88: #{stochastic_two_layer_rgcn.3} parent=80 // pred_region
          %445 = vst [vmem:[%s438] sm:$0xff] 0.0
          %446 = vst [vmem:[%s438 + $0x8] sm:$0xff] 0.0
          %447 = vst [vmem:[%s438 + $0x10] sm:$0xff] 0.0
          %448 = vst [vmem:[%s438 + $0x18] sm:$0xff] 0.0
          %449 = vst [vmem:[%s438 + $0x20] sm:$0xff] 0.0
          %450 = vst [vmem:[%s438 + $0x28] sm:$0xff] 0.0
          %451 = vst [vmem:[%s438 + $0x30] sm:$0xff] 0.0
          %452 = vst [vmem:[%s438 + $0x38] sm:$0xff] 0.0
          %453 = vst [vmem:[%s438 + $0x40] sm:$0xff] 0.0
          %454 = vst [vmem:[%s438 + $0x48] sm:$0xff] 0.0
          %455 = vst [vmem:[%s438 + $0x50] sm:$0xff] 0.0
          %456 = vst [vmem:[%s438 + $0x58] sm:$0xff] 0.0
          %457 = vst [vmem:[%s438 + $0x60] sm:$0xff] 0.0
          %458 = vst [vmem:[%s438 + $0x68] sm:$0xff] 0.0
          %459 = vst [vmem:[%s438 + $0x70] sm:$0xff] 0.0
          %460 = vst [vmem:[%s438 + $0x78] sm:$0xff] 0.0
        $region89: #{stochastic_two_layer_rgcn.3} parent=80 // pred_fallthru
          _
        %v461 = vld [vmem:[%s420] sm:$0xf]
        %v462 = vld [vmem:[%s420 + $0x4] sm:$0xf]
        %v463 = vld [vmem:[%s420 + $0x8] sm:$0xf]
        %v464 = vld [vmem:[%s420 + $0xc] sm:$0xf]
        %v465 = vld [vmem:[%s420 + $0x10] sm:$0xf]
        %v466 = vld [vmem:[%s420 + $0x14] sm:$0xf]
        %v467 = vld [vmem:[%s420 + $0x18] sm:$0xf]
        %v468 = vld [vmem:[%s420 + $0x1c] sm:$0xf]
        %v469 = vld [vmem:[%s420 + $0x20] sm:$0xf]
        %v470 = vld [vmem:[%s420 + $0x24] sm:$0xf]
        %v471 = vld [vmem:[%s420 + $0x28] sm:$0xf]
        %v472 = vld [vmem:[%s420 + $0x2c] sm:$0xf]
        %v473 = vld [vmem:[%s420 + $0x30] sm:$0xf]
        %v474 = vld [vmem:[%s420 + $0x34] sm:$0xf]
        %v475 = vld [vmem:[%s420 + $0x38] sm:$0xf]
        %v476 = vld [vmem:[%s420 + $0x3c] sm:$0xf]
        %v477 = vld [vmem:[%s2] sm:$0xf]
        %v478 = vld [vmem:[%s2 + $0x4] sm:$0xf]
        %v479 = vld [vmem:[%s2 + $0x8] sm:$0xf]
        %v480 = vld [vmem:[%s2 + $0xc] sm:$0xf]
        %v481 = vld [vmem:[%s2 + $0x10] sm:$0xf]
        %v482 = vld [vmem:[%s2 + $0x14] sm:$0xf]
        %v483 = vld [vmem:[%s2 + $0x18] sm:$0xf]
        %v484 = vld [vmem:[%s2 + $0x1c] sm:$0xf]
        %v485 = vld [vmem:[%s2 + $0x20] sm:$0xf]
        %v486 = vld [vmem:[%s2 + $0x24] sm:$0xf]
        %v487 = vld [vmem:[%s2 + $0x28] sm:$0xf]
        %v488 = vld [vmem:[%s2 + $0x2c] sm:$0xf]
        %v489 = vld [vmem:[%s2 + $0x30] sm:$0xf]
        %v490 = vld [vmem:[%s2 + $0x34] sm:$0xf]
        %v491 = vld [vmem:[%s2 + $0x38] sm:$0xf]
        %v492 = vld [vmem:[%s2 + $0x3c] sm:$0xf]
        %v509 = vunpack.c.l.b16 %v461
        %v510 = vunpack.c.l.b16 %v462
        %v511 = vunpack.c.l.b16 %v463
        %v512 = vunpack.c.l.b16 %v464
        %v513 = vunpack.c.l.b16 %v465
        %v514 = vunpack.c.l.b16 %v466
        %v515 = vunpack.c.l.b16 %v467
        %v516 = vunpack.c.l.b16 %v468
        %v517 = vunpack.c.l.b16 %v469
        %v518 = vunpack.c.l.b16 %v470
        %v519 = vunpack.c.l.b16 %v471
        %v520 = vunpack.c.l.b16 %v472
        %v521 = vunpack.c.l.b16 %v473
        %v522 = vunpack.c.l.b16 %v474
        %v523 = vunpack.c.l.b16 %v475
        %v524 = vunpack.c.l.b16 %v476
        %v525 = vpack.c.b16 %v510, %v509
        %v526 = vpack.c.b16 %v512, %v511
        %v527 = vpack.c.b16 %v514, %v513
        %v528 = vpack.c.b16 %v516, %v515
        %v529 = vpack.c.b16 %v518, %v517
        %v530 = vpack.c.b16 %v520, %v519
        %v531 = vpack.c.b16 %v522, %v521
        %v532 = vpack.c.b16 %v524, %v523
        %v557 = vunpack.c.l.b16 %v477
        %v558 = vunpack.c.l.b16 %v478
        %v559 = vunpack.c.l.b16 %v479
        %v560 = vunpack.c.l.b16 %v480
        %v561 = vunpack.c.l.b16 %v481
        %v562 = vunpack.c.l.b16 %v482
        %v563 = vunpack.c.l.b16 %v483
        %v564 = vunpack.c.l.b16 %v484
        %v565 = vunpack.c.l.b16 %v485
        %v566 = vunpack.c.l.b16 %v486
        %v567 = vunpack.c.l.b16 %v487
        %v568 = vunpack.c.l.b16 %v488
        %v569 = vunpack.c.l.b16 %v489
        %v570 = vunpack.c.l.b16 %v490
        %v571 = vunpack.c.l.b16 %v491
        %v572 = vunpack.c.l.b16 %v492
        %v573 = vpack.c.b16 %v558, %v557
        %v574 = vpack.c.b16 %v560, %v559
        %v575 = vpack.c.b16 %v562, %v561
        %v576 = vpack.c.b16 %v564, %v563
        %v577 = vpack.c.b16 %v566, %v565
        %v578 = vpack.c.b16 %v568, %v567
        %v579 = vpack.c.b16 %v570, %v569
        %v580 = vpack.c.b16 %v572, %v571
        %589 = vmatprep.subr.bf16.mxu0 0
        %590 = vmatpush1.bf16.msra.mxu0 %v580
        %591 = vmatprep.subr.bf16.mxu0 0
        %592 = vmatpush1.bf16.msra.mxu0 %v579
        %593 = vmatprep.subr.bf16.mxu0 0
        %594 = vmatpush1.bf16.msra.mxu0 %v578
        %595 = vmatprep.subr.bf16.mxu0 0
        %596 = vmatpush1.bf16.msra.mxu0 %v577
        %597 = vmatprep.subr.bf16.mxu0 0
        %598 = vmatpush1.bf16.msra.mxu0 %v576
        %599 = vmatprep.subr.bf16.mxu0 0
        %600 = vmatpush1.bf16.msra.mxu0 %v575
        %601 = vmatprep.subr.bf16.mxu0 0
        %602 = vmatpush1.bf16.msra.mxu0 %v574
        %603 = vmatprep.subr.bf16.mxu0 0
        %604 = vmatpush1.bf16.msra.mxu0 %v573
        %605 = vmatprep.subr.bf16.mxu0 0
        %606 = vmatpush2.bf16.msra.mxu0 0
        %607 = vmatprep.subr.bf16.mxu0 0
        %608 = vmatpush2.bf16.msra.mxu0 0
        %609 = vmatprep.subr.bf16.mxu0 0
        %610 = vmatpush2.bf16.msra.mxu0 0
        %611 = vmatprep.subr.bf16.mxu0 0
        %612 = vmatpush2.bf16.msra.mxu0 0
        %613 = vmatprep.subr.bf16.mxu0 0
        %614 = vmatpush2.bf16.msra.mxu0 0
        %615 = vmatprep.subr.bf16.mxu0 0
        %616 = vmatpush2.bf16.msra.mxu0 0
        %617 = vmatprep.subr.bf16.mxu0 0
        %618 = vmatpush2.bf16.msra.mxu0 0
        %619 = vmatprep.subr.bf16.mxu0 0
        %620 = vmatpush2.bf16.msra.mxu0 0
        %621 = vmatprep.mubr.bf16.mxu0 0
        %622 = vmatmul.mubr.bf16.gmra.mxu0 %v525
        %v623 = vpop.f32.mrf.mxu0
        %v624 = vadd.f32 0.0, %v623
        %v625 = vpop.f32.mrf.mxu0
        %v626 = vpop.f32.mrf.mxu0
        %v627 = vadd.f32 0.0, %v626
        %v628 = vpop.f32.mrf.mxu0
        %629 = vmatprep.mubr.bf16.mxu0 0
        %630 = vmatmul.mubr.bf16.gmra.mxu0 %v526
        %v631 = vpop.f32.mrf.mxu0
        %v632 = vadd.f32 0.0, %v631
        %v633 = vpop.f32.mrf.mxu0
        %v634 = vpop.f32.mrf.mxu0
        %v635 = vadd.f32 0.0, %v634
        %v636 = vpop.f32.mrf.mxu0
        %637 = vmatprep.mubr.bf16.mxu0 0
        %638 = vmatmul.mubr.bf16.gmra.mxu0 %v527
        %v639 = vpop.f32.mrf.mxu0
        %v640 = vadd.f32 0.0, %v639
        %v641 = vpop.f32.mrf.mxu0
        %v642 = vpop.f32.mrf.mxu0
        %v643 = vadd.f32 0.0, %v642
        %v644 = vpop.f32.mrf.mxu0
        %645 = vmatprep.mubr.bf16.mxu0 0
        %646 = vmatmul.mubr.bf16.gmra.mxu0 %v528
        %v647 = vpop.f32.mrf.mxu0
        %v648 = vadd.f32 0.0, %v647
        %v649 = vpop.f32.mrf.mxu0
        %v650 = vpop.f32.mrf.mxu0
        %v651 = vadd.f32 0.0, %v650
        %v652 = vpop.f32.mrf.mxu0
        %653 = vmatprep.mubr.bf16.mxu0 0
        %654 = vmatmul.mubr.bf16.gmra.mxu0 %v529
        %v655 = vpop.f32.mrf.mxu0
        %v656 = vadd.f32 0.0, %v655
        %v657 = vpop.f32.mrf.mxu0
        %v658 = vpop.f32.mrf.mxu0
        %v659 = vadd.f32 0.0, %v658
        %v660 = vpop.f32.mrf.mxu0
        %661 = vmatprep.mubr.bf16.mxu0 0
        %662 = vmatmul.mubr.bf16.gmra.mxu0 %v530
        %v663 = vpop.f32.mrf.mxu0
        %v664 = vadd.f32 0.0, %v663
        %v665 = vpop.f32.mrf.mxu0
        %v666 = vpop.f32.mrf.mxu0
        %v667 = vadd.f32 0.0, %v666
        %v668 = vpop.f32.mrf.mxu0
        %669 = vmatprep.mubr.bf16.mxu0 0
        %670 = vmatmul.mubr.bf16.gmra.mxu0 %v531
        %v671 = vpop.f32.mrf.mxu0
        %v672 = vadd.f32 0.0, %v671
        %v673 = vpop.f32.mrf.mxu0
        %v674 = vpop.f32.mrf.mxu0
        %v675 = vadd.f32 0.0, %v674
        %v676 = vpop.f32.mrf.mxu0
        %677 = vmatprep.mubr.bf16.mxu0 0
        %678 = vmatmul.mubr.bf16.gmra.mxu0 %v532
        %v679 = vpop.f32.mrf.mxu0
        %v680 = vadd.f32 0.0, %v679
        %v681 = vpop.f32.mrf.mxu0
        %v682 = vpop.f32.mrf.mxu0
        %v683 = vadd.f32 0.0, %v682
        %v684 = vpop.f32.mrf.mxu0
        %685 = vdwg.mxu0
        %v686 = vld [vmem:[%s426] sm:$0xff]
        %v687 = vld [vmem:[%s426 + $0x8] sm:$0xff]
        %v688 = vld [vmem:[%s426 + $0x10] sm:$0xff]
        %v689 = vld [vmem:[%s426 + $0x18] sm:$0xff]
        %v690 = vld [vmem:[%s426 + $0x20] sm:$0xff]
        %v691 = vld [vmem:[%s426 + $0x28] sm:$0xff]
        %v692 = vld [vmem:[%s426 + $0x30] sm:$0xff]
        %v693 = vld [vmem:[%s426 + $0x38] sm:$0xff]
        %v694 = vld [vmem:[%s426 + $0x40] sm:$0xff]
        %v695 = vld [vmem:[%s426 + $0x48] sm:$0xff]
        %v696 = vld [vmem:[%s426 + $0x50] sm:$0xff]
        %v697 = vld [vmem:[%s426 + $0x58] sm:$0xff]
        %v698 = vld [vmem:[%s426 + $0x60] sm:$0xff]
        %v699 = vld [vmem:[%s426 + $0x68] sm:$0xff]
        %v700 = vld [vmem:[%s426 + $0x70] sm:$0xff]
        %v701 = vld [vmem:[%s426 + $0x78] sm:$0xff]
        %703 = vset.pattern.permute.xlu0 0
        %704 = vperm.xlu0 %703, %v686
        %v705 = vpop.permute.xlu0 %704
        %708 = vset.pattern.permute.xlu0 0
        %709 = vperm.xlu0 %708, %v687
        %v710 = vpop.permute.xlu0 %709
        %713 = vset.pattern.permute.xlu0 0
        %714 = vperm.xlu0 %713, %v688
        %v715 = vpop.permute.xlu0 %714
        %718 = vset.pattern.permute.xlu0 0
        %719 = vperm.xlu0 %718, %v689
        %v720 = vpop.permute.xlu0 %719
        %723 = vset.pattern.permute.xlu0 0
        %724 = vperm.xlu0 %723, %v690
        %v725 = vpop.permute.xlu0 %724
        %728 = vset.pattern.permute.xlu0 0
        %729 = vperm.xlu0 %728, %v691
        %v730 = vpop.permute.xlu0 %729
        %733 = vset.pattern.permute.xlu0 0
        %734 = vperm.xlu0 %733, %v692
        %v735 = vpop.permute.xlu0 %734
        %738 = vset.pattern.permute.xlu0 0
        %739 = vperm.xlu0 %738, %v693
        %v740 = vpop.permute.xlu0 %739
        %743 = vset.pattern.permute.xlu0 0
        %744 = vperm.xlu0 %743, %v694
        %v745 = vpop.permute.xlu0 %744
        %748 = vset.pattern.permute.xlu0 0
        %749 = vperm.xlu0 %748, %v695
        %v750 = vpop.permute.xlu0 %749
        %753 = vset.pattern.permute.xlu0 0
        %754 = vperm.xlu0 %753, %v696
        %v755 = vpop.permute.xlu0 %754
        %758 = vset.pattern.permute.xlu0 0
        %759 = vperm.xlu0 %758, %v697
        %v760 = vpop.permute.xlu0 %759
        %763 = vset.pattern.permute.xlu0 0
        %764 = vperm.xlu0 %763, %v698
        %v765 = vpop.permute.xlu0 %764
        %768 = vset.pattern.permute.xlu0 0
        %769 = vperm.xlu0 %768, %v699
        %v770 = vpop.permute.xlu0 %769
        %773 = vset.pattern.permute.xlu0 0
        %774 = vperm.xlu0 %773, %v700
        %v775 = vpop.permute.xlu0 %774
        %778 = vset.pattern.permute.xlu0 0
        %779 = vperm.xlu0 %778, %v701
        %v780 = vpop.permute.xlu0 %779
        %v782 = vmul.f32 %v624, %v705
        %v783 = vmul.f32 %v627, %v710
        %v784 = vmul.f32 %v632, %v715
        %v785 = vmul.f32 %v635, %v720
        %v786 = vmul.f32 %v640, %v725
        %v787 = vmul.f32 %v643, %v730
        %v788 = vmul.f32 %v648, %v735
        %v789 = vmul.f32 %v651, %v740
        %v790 = vmul.f32 %v656, %v745
        %v791 = vmul.f32 %v659, %v750
        %v792 = vmul.f32 %v664, %v755
        %v793 = vmul.f32 %v667, %v760
        %v794 = vmul.f32 %v672, %v765
        %v795 = vmul.f32 %v675, %v770
        %v796 = vmul.f32 %v680, %v775
        %v797 = vmul.f32 %v683, %v780
        %v798 = vpack.c.bf16 %v783, %v782
        %v799 = vpack.c.bf16 %v785, %v784
        %v800 = vpack.c.bf16 %v787, %v786
        %v801 = vpack.c.bf16 %v789, %v788
        %v802 = vpack.c.bf16 %v791, %v790
        %v803 = vpack.c.bf16 %v793, %v792
        %v804 = vpack.c.bf16 %v795, %v794
        %v805 = vpack.c.bf16 %v797, %v796
        %v806 = vld [vmem:[%s438] sm:$0xff]
        %v807 = vld [vmem:[%s438 + $0x8] sm:$0xff]
        %v808 = vld [vmem:[%s438 + $0x10] sm:$0xff]
        %v809 = vld [vmem:[%s438 + $0x18] sm:$0xff]
        %v810 = vld [vmem:[%s438 + $0x20] sm:$0xff]
        %v811 = vld [vmem:[%s438 + $0x28] sm:$0xff]
        %v812 = vld [vmem:[%s438 + $0x30] sm:$0xff]
        %v813 = vld [vmem:[%s438 + $0x38] sm:$0xff]
        %v814 = vld [vmem:[%s438 + $0x40] sm:$0xff]
        %v815 = vld [vmem:[%s438 + $0x48] sm:$0xff]
        %v816 = vld [vmem:[%s438 + $0x50] sm:$0xff]
        %v817 = vld [vmem:[%s438 + $0x58] sm:$0xff]
        %v818 = vld [vmem:[%s438 + $0x60] sm:$0xff]
        %v819 = vld [vmem:[%s438 + $0x68] sm:$0xff]
        %v820 = vld [vmem:[%s438 + $0x70] sm:$0xff]
        %v821 = vld [vmem:[%s438 + $0x78] sm:$0xff]
        %v822 = vld [vmem:[%s373] sm:$0xf]
        %v823 = vld [vmem:[%s373 + $0x4] sm:$0xf]
        %v824 = vld [vmem:[%s373 + $0x8] sm:$0xf]
        %v825 = vld [vmem:[%s373 + $0xc] sm:$0xf]
        %v826 = vld [vmem:[%s373 + $0x10] sm:$0xf]
        %v827 = vld [vmem:[%s373 + $0x14] sm:$0xf]
        %v828 = vld [vmem:[%s373 + $0x18] sm:$0xf]
        %v829 = vld [vmem:[%s373 + $0x1c] sm:$0xf]
        %v830 = vld [vmem:[%s373 + $0x20] sm:$0xf]
        %v831 = vld [vmem:[%s373 + $0x24] sm:$0xf]
        %v832 = vld [vmem:[%s373 + $0x28] sm:$0xf]
        %v833 = vld [vmem:[%s373 + $0x2c] sm:$0xf]
        %v834 = vld [vmem:[%s373 + $0x30] sm:$0xf]
        %v835 = vld [vmem:[%s373 + $0x34] sm:$0xf]
        %v836 = vld [vmem:[%s373 + $0x38] sm:$0xf]
        %v837 = vld [vmem:[%s373 + $0x3c] sm:$0xf]
        %v854 = vunpack.c.l.b16 %v822
        %v855 = vunpack.c.l.b16 %v823
        %v856 = vunpack.c.l.b16 %v824
        %v857 = vunpack.c.l.b16 %v825
        %v858 = vunpack.c.l.b16 %v826
        %v859 = vunpack.c.l.b16 %v827
        %v860 = vunpack.c.l.b16 %v828
        %v861 = vunpack.c.l.b16 %v829
        %v862 = vunpack.c.l.b16 %v830
        %v863 = vunpack.c.l.b16 %v831
        %v864 = vunpack.c.l.b16 %v832
        %v865 = vunpack.c.l.b16 %v833
        %v866 = vunpack.c.l.b16 %v834
        %v867 = vunpack.c.l.b16 %v835
        %v868 = vunpack.c.l.b16 %v836
        %v869 = vunpack.c.l.b16 %v837
        %v870 = vpack.c.b16 %v855, %v854
        %v871 = vpack.c.b16 %v857, %v856
        %v872 = vpack.c.b16 %v859, %v858
        %v873 = vpack.c.b16 %v861, %v860
        %v874 = vpack.c.b16 %v863, %v862
        %v875 = vpack.c.b16 %v865, %v864
        %v876 = vpack.c.b16 %v867, %v866
        %v877 = vpack.c.b16 %v869, %v868
        %886 = vmatprep.subr.bf16.mxu0 0
        %887 = vmatpush1.bf16.msra.mxu0 %v805
        %888 = vmatprep.subr.bf16.mxu0 0
        %889 = vmatpush1.bf16.msra.mxu0 %v804
        %890 = vmatprep.subr.bf16.mxu0 0
        %891 = vmatpush1.bf16.msra.mxu0 %v803
        %892 = vmatprep.subr.bf16.mxu0 0
        %893 = vmatpush1.bf16.msra.mxu0 %v802
        %894 = vmatprep.subr.bf16.mxu0 0
        %895 = vmatpush1.bf16.msra.mxu0 %v801
        %896 = vmatprep.subr.bf16.mxu0 0
        %897 = vmatpush1.bf16.msra.mxu0 %v800
        %898 = vmatprep.subr.bf16.mxu0 0
        %899 = vmatpush1.bf16.msra.mxu0 %v799
        %900 = vmatprep.subr.bf16.mxu0 0
        %901 = vmatpush1.bf16.msra.mxu0 %v798
        %902 = vmatprep.subr.bf16.mxu0 0
        %903 = vmatpush2.bf16.msra.mxu0 0
        %904 = vmatprep.subr.bf16.mxu0 0
        %905 = vmatpush2.bf16.msra.mxu0 0
        %906 = vmatprep.subr.bf16.mxu0 0
        %907 = vmatpush2.bf16.msra.mxu0 0
        %908 = vmatprep.subr.bf16.mxu0 0
        %909 = vmatpush2.bf16.msra.mxu0 0
        %910 = vmatprep.subr.bf16.mxu0 0
        %911 = vmatpush2.bf16.msra.mxu0 0
        %912 = vmatprep.subr.bf16.mxu0 0
        %913 = vmatpush2.bf16.msra.mxu0 0
        %914 = vmatprep.subr.bf16.mxu0 0
        %915 = vmatpush2.bf16.msra.mxu0 0
        %916 = vmatprep.subr.bf16.mxu0 0
        %917 = vmatpush2.bf16.msra.mxu0 0
        %918 = vmatprep.mubr.bf16.mxu0 0
        %919 = vmatmul.mubr.bf16.gmra.mxu0 %v870
        %v920 = vpop.f32.mrf.mxu0
        %v921 = vadd.f32 0.0, %v920
        %v922 = vpop.f32.mrf.mxu0
        %v923 = vpop.f32.mrf.mxu0
        %v924 = vadd.f32 0.0, %v923
        %v925 = vpop.f32.mrf.mxu0
        %926 = vmatprep.mubr.bf16.mxu0 0
        %927 = vmatmul.mubr.bf16.gmra.mxu0 %v871
        %v928 = vpop.f32.mrf.mxu0
        %v929 = vadd.f32 0.0, %v928
        %v930 = vpop.f32.mrf.mxu0
        %v931 = vpop.f32.mrf.mxu0
        %v932 = vadd.f32 0.0, %v931
        %v933 = vpop.f32.mrf.mxu0
        %934 = vmatprep.mubr.bf16.mxu0 0
        %935 = vmatmul.mubr.bf16.gmra.mxu0 %v872
        %v936 = vpop.f32.mrf.mxu0
        %v937 = vadd.f32 0.0, %v936
        %v938 = vpop.f32.mrf.mxu0
        %v939 = vpop.f32.mrf.mxu0
        %v940 = vadd.f32 0.0, %v939
        %v941 = vpop.f32.mrf.mxu0
        %942 = vmatprep.mubr.bf16.mxu0 0
        %943 = vmatmul.mubr.bf16.gmra.mxu0 %v873
        %v944 = vpop.f32.mrf.mxu0
        %v945 = vadd.f32 0.0, %v944
        %v946 = vpop.f32.mrf.mxu0
        %v947 = vpop.f32.mrf.mxu0
        %v948 = vadd.f32 0.0, %v947
        %v949 = vpop.f32.mrf.mxu0
        %950 = vmatprep.mubr.bf16.mxu0 0
        %951 = vmatmul.mubr.bf16.gmra.mxu0 %v874
        %v952 = vpop.f32.mrf.mxu0
        %v953 = vadd.f32 0.0, %v952
        %v954 = vpop.f32.mrf.mxu0
        %v955 = vpop.f32.mrf.mxu0
        %v956 = vadd.f32 0.0, %v955
        %v957 = vpop.f32.mrf.mxu0
        %958 = vmatprep.mubr.bf16.mxu0 0
        %959 = vmatmul.mubr.bf16.gmra.mxu0 %v875
        %v960 = vpop.f32.mrf.mxu0
        %v961 = vadd.f32 0.0, %v960
        %v962 = vpop.f32.mrf.mxu0
        %v963 = vpop.f32.mrf.mxu0
        %v964 = vadd.f32 0.0, %v963
        %v965 = vpop.f32.mrf.mxu0
        %966 = vmatprep.mubr.bf16.mxu0 0
        %967 = vmatmul.mubr.bf16.gmra.mxu0 %v876
        %v968 = vpop.f32.mrf.mxu0
        %v969 = vadd.f32 0.0, %v968
        %v970 = vpop.f32.mrf.mxu0
        %v971 = vpop.f32.mrf.mxu0
        %v972 = vadd.f32 0.0, %v971
        %v973 = vpop.f32.mrf.mxu0
        %974 = vmatprep.mubr.bf16.mxu0 0
        %975 = vmatmul.mubr.bf16.gmra.mxu0 %v877
        %v976 = vpop.f32.mrf.mxu0
        %v977 = vadd.f32 0.0, %v976
        %v978 = vpop.f32.mrf.mxu0
        %v979 = vpop.f32.mrf.mxu0
        %v980 = vadd.f32 0.0, %v979
        %v981 = vpop.f32.mrf.mxu0
        %982 = vdwg.mxu0
        %v983 = vadd.f32 %v806, %v921
        %v984 = vadd.f32 %v807, %v924
        %v985 = vadd.f32 %v808, %v929
        %v986 = vadd.f32 %v809, %v932
        %v987 = vadd.f32 %v810, %v937
        %v988 = vadd.f32 %v811, %v940
        %v989 = vadd.f32 %v812, %v945
        %v990 = vadd.f32 %v813, %v948
        %v991 = vadd.f32 %v814, %v953
        %v992 = vadd.f32 %v815, %v956
        %v993 = vadd.f32 %v816, %v961
        %v994 = vadd.f32 %v817, %v964
        %v995 = vadd.f32 %v818, %v969
        %v996 = vadd.f32 %v819, %v972
        %v997 = vadd.f32 %v820, %v977
        %v998 = vadd.f32 %v821, %v980
        %999 = vst [vmem:[%s438] sm:$0xff] %v983
        %1000 = vst [vmem:[%s438 + $0x8] sm:$0xff] %v984
        %1001 = vst [vmem:[%s438 + $0x10] sm:$0xff] %v985
        %1002 = vst [vmem:[%s438 + $0x18] sm:$0xff] %v986
        %1003 = vst [vmem:[%s438 + $0x20] sm:$0xff] %v987
        %1004 = vst [vmem:[%s438 + $0x28] sm:$0xff] %v988
        %1005 = vst [vmem:[%s438 + $0x30] sm:$0xff] %v989
        %1006 = vst [vmem:[%s438 + $0x38] sm:$0xff] %v990
        %1007 = vst [vmem:[%s438 + $0x40] sm:$0xff] %v991
        %1008 = vst [vmem:[%s438 + $0x48] sm:$0xff] %v992
        %1009 = vst [vmem:[%s438 + $0x50] sm:$0xff] %v993
        %1010 = vst [vmem:[%s438 + $0x58] sm:$0xff] %v994
        %1011 = vst [vmem:[%s438 + $0x60] sm:$0xff] %v995
        %1012 = vst [vmem:[%s438 + $0x68] sm:$0xff] %v996
        %1013 = vst [vmem:[%s438 + $0x70] sm:$0xff] %v997
        %1014 = vst [vmem:[%s438 + $0x78] sm:$0xff] %v998
        %p1015 = scmp.eq.s32.totalorder %s22, 2
        // Predicated region
        $region90: #{stochastic_two_layer_rgcn.3} parent=80 // pred_check
          %p1016 = pneg %p1015
        $region91: #{stochastic_two_layer_rgcn.3} parent=80 // pred_check_branch
          %1018 = sbr.rel (%p1016) target = $region93
        $region92: #{stochastic_two_layer_rgcn.3} parent=80 // pred_region
          %v1019 = vld [vmem:[%s438] sm:$0xff]
          %v1020 = vld [vmem:[%s438 + $0x8] sm:$0xff]
          %v1021 = vld [vmem:[%s438 + $0x10] sm:$0xff]
          %v1022 = vld [vmem:[%s438 + $0x18] sm:$0xff]
          %v1023 = vld [vmem:[%s438 + $0x20] sm:$0xff]
          %v1024 = vld [vmem:[%s438 + $0x28] sm:$0xff]
          %v1025 = vld [vmem:[%s438 + $0x30] sm:$0xff]
          %v1026 = vld [vmem:[%s438 + $0x38] sm:$0xff]
          %v1027 = vld [vmem:[%s438 + $0x40] sm:$0xff]
          %v1028 = vld [vmem:[%s438 + $0x48] sm:$0xff]
          %v1029 = vld [vmem:[%s438 + $0x50] sm:$0xff]
          %v1030 = vld [vmem:[%s438 + $0x58] sm:$0xff]
          %v1031 = vld [vmem:[%s438 + $0x60] sm:$0xff]
          %v1032 = vld [vmem:[%s438 + $0x68] sm:$0xff]
          %v1033 = vld [vmem:[%s438 + $0x70] sm:$0xff]
          %v1034 = vld [vmem:[%s438 + $0x78] sm:$0xff]
          %v1035 = vld [vmem:[%s432] sm:$0xff]
          %v1036 = vld [vmem:[%s432 + $0x8] sm:$0xff]
          %v1037 = vld [vmem:[%s432 + $0x10] sm:$0xff]
          %v1038 = vld [vmem:[%s432 + $0x18] sm:$0xff]
          %v1039 = vld [vmem:[%s432 + $0x20] sm:$0xff]
          %v1040 = vld [vmem:[%s432 + $0x28] sm:$0xff]
          %v1041 = vld [vmem:[%s432 + $0x30] sm:$0xff]
          %v1042 = vld [vmem:[%s432 + $0x38] sm:$0xff]
          %v1043 = vld [vmem:[%s432 + $0x40] sm:$0xff]
          %v1044 = vld [vmem:[%s432 + $0x48] sm:$0xff]
          %v1045 = vld [vmem:[%s432 + $0x50] sm:$0xff]
          %v1046 = vld [vmem:[%s432 + $0x58] sm:$0xff]
          %v1047 = vld [vmem:[%s432 + $0x60] sm:$0xff]
          %v1048 = vld [vmem:[%s432 + $0x68] sm:$0xff]
          %v1049 = vld [vmem:[%s432 + $0x70] sm:$0xff]
          %v1050 = vld [vmem:[%s432 + $0x78] sm:$0xff]
          %1052 = vset.pattern.permute.xlu0 0
          %1053 = vperm.xlu0 %1052, %v1035
          %v1054 = vpop.permute.xlu0 %1053
          %1057 = vset.pattern.permute.xlu0 0
          %1058 = vperm.xlu0 %1057, %v1036
          %v1059 = vpop.permute.xlu0 %1058
          %1062 = vset.pattern.permute.xlu0 0
          %1063 = vperm.xlu0 %1062, %v1037
          %v1064 = vpop.permute.xlu0 %1063
          %1067 = vset.pattern.permute.xlu0 0
          %1068 = vperm.xlu0 %1067, %v1038
          %v1069 = vpop.permute.xlu0 %1068
          %1072 = vset.pattern.permute.xlu0 0
          %1073 = vperm.xlu0 %1072, %v1039
          %v1074 = vpop.permute.xlu0 %1073
          %1077 = vset.pattern.permute.xlu0 0
          %1078 = vperm.xlu0 %1077, %v1040
          %v1079 = vpop.permute.xlu0 %1078
          %1082 = vset.pattern.permute.xlu0 0
          %1083 = vperm.xlu0 %1082, %v1041
          %v1084 = vpop.permute.xlu0 %1083
          %1087 = vset.pattern.permute.xlu0 0
          %1088 = vperm.xlu0 %1087, %v1042
          %v1089 = vpop.permute.xlu0 %1088
          %1092 = vset.pattern.permute.xlu0 0
          %1093 = vperm.xlu0 %1092, %v1043
          %v1094 = vpop.permute.xlu0 %1093
          %1097 = vset.pattern.permute.xlu0 0
          %1098 = vperm.xlu0 %1097, %v1044
          %v1099 = vpop.permute.xlu0 %1098
          %1102 = vset.pattern.permute.xlu0 0
          %1103 = vperm.xlu0 %1102, %v1045
          %v1104 = vpop.permute.xlu0 %1103
          %1107 = vset.pattern.permute.xlu0 0
          %1108 = vperm.xlu0 %1107, %v1046
          %v1109 = vpop.permute.xlu0 %1108
          %1112 = vset.pattern.permute.xlu0 0
          %1113 = vperm.xlu0 %1112, %v1047
          %v1114 = vpop.permute.xlu0 %1113
          %1117 = vset.pattern.permute.xlu0 0
          %1118 = vperm.xlu0 %1117, %v1048
          %v1119 = vpop.permute.xlu0 %1118
          %1122 = vset.pattern.permute.xlu0 0
          %1123 = vperm.xlu0 %1122, %v1049
          %v1124 = vpop.permute.xlu0 %1123
          %1127 = vset.pattern.permute.xlu0 0
          %1128 = vperm.xlu0 %1127, %v1050
          %v1129 = vpop.permute.xlu0 %1128
          %v1131 = vmul.f32 %v1019, %v1054
          %v1132 = vmul.f32 %v1020, %v1059
          %v1133 = vmul.f32 %v1021, %v1064
          %v1134 = vmul.f32 %v1022, %v1069
          %v1135 = vmul.f32 %v1023, %v1074
          %v1136 = vmul.f32 %v1024, %v1079
          %v1137 = vmul.f32 %v1025, %v1084
          %v1138 = vmul.f32 %v1026, %v1089
          %v1139 = vmul.f32 %v1027, %v1094
          %v1140 = vmul.f32 %v1028, %v1099
          %v1141 = vmul.f32 %v1029, %v1104
          %v1142 = vmul.f32 %v1030, %v1109
          %v1143 = vmul.f32 %v1031, %v1114
          %v1144 = vmul.f32 %v1032, %v1119
          %v1145 = vmul.f32 %v1033, %v1124
          %v1146 = vmul.f32 %v1034, %v1129
          %v1147 = vld [vmem:[%s5] sm:$0x1]
          %v1149 = vlaneseq
          %v1150 = vshrl.u32 %v1149, 7
          %v1151 = vsub.s32 0, %v1150
          %v1152 = vrot.slane %v1147, %v1151
          %v1154 = vadd.f32 %v1131, %v1152
          %v1155 = vadd.f32 %v1132, %v1152
          %v1156 = vadd.f32 %v1133, %v1152
          %v1157 = vadd.f32 %v1134, %v1152
          %v1158 = vadd.f32 %v1135, %v1152
          %v1159 = vadd.f32 %v1136, %v1152
          %v1160 = vadd.f32 %v1137, %v1152
          %v1161 = vadd.f32 %v1138, %v1152
          %v1162 = vadd.f32 %v1139, %v1152
          %v1163 = vadd.f32 %v1140, %v1152
          %v1164 = vadd.f32 %v1141, %v1152
          %v1165 = vadd.f32 %v1142, %v1152
          %v1166 = vadd.f32 %v1143, %v1152
          %v1167 = vadd.f32 %v1144, %v1152
          %v1168 = vadd.f32 %v1145, %v1152
          %v1169 = vadd.f32 %v1146, %v1152
          %v1170 = vmax.f32 %v1154, 0.0
          %v1171 = vmax.f32 %v1155, 0.0
          %v1172 = vmax.f32 %v1156, 0.0
          %v1173 = vmax.f32 %v1157, 0.0
          %v1174 = vmax.f32 %v1158, 0.0
          %v1175 = vmax.f32 %v1159, 0.0
          %v1176 = vmax.f32 %v1160, 0.0
          %v1177 = vmax.f32 %v1161, 0.0
          %v1178 = vmax.f32 %v1162, 0.0
          %v1179 = vmax.f32 %v1163, 0.0
          %v1180 = vmax.f32 %v1164, 0.0
          %v1181 = vmax.f32 %v1165, 0.0
          %v1182 = vmax.f32 %v1166, 0.0
          %v1183 = vmax.f32 %v1167, 0.0
          %v1184 = vmax.f32 %v1168, 0.0
          %v1185 = vmax.f32 %v1169, 0.0
          %1186 = vst [vmem:[%s438] sm:$0xff] %v1170
          %1187 = vst [vmem:[%s438 + $0x8] sm:$0xff] %v1171
          %1188 = vst [vmem:[%s438 + $0x10] sm:$0xff] %v1172
          %1189 = vst [vmem:[%s438 + $0x18] sm:$0xff] %v1173
          %1190 = vst [vmem:[%s438 + $0x20] sm:$0xff] %v1174
          %1191 = vst [vmem:[%s438 + $0x28] sm:$0xff] %v1175
          %1192 = vst [vmem:[%s438 + $0x30] sm:$0xff] %v1176
          %1193 = vst [vmem:[%s438 + $0x38] sm:$0xff] %v1177
          %1194 = vst [vmem:[%s438 + $0x40] sm:$0xff] %v1178
          %1195 = vst [vmem:[%s438 + $0x48] sm:$0xff] %v1179
          %1196 = vst [vmem:[%s438 + $0x50] sm:$0xff] %v1180
          %1197 = vst [vmem:[%s438 + $0x58] sm:$0xff] %v1181
          %1198 = vst [vmem:[%s438 + $0x60] sm:$0xff] %v1182
          %1199 = vst [vmem:[%s438 + $0x68] sm:$0xff] %v1183
          %1200 = vst [vmem:[%s438 + $0x70] sm:$0xff] %v1184
          %1201 = vst [vmem:[%s438 + $0x78] sm:$0xff] %v1185
        $region93: #{stochastic_two_layer_rgcn.3} parent=80 // pred_fallthru
          _
        %s1202 = smul.u32 16, %s21
        %p1203 = scmp.lt.s32.totalorder %s1202, 31
        %s1204 = scalar_select %p1203, %s1202, 31
        %s1205 = smul.addr %s1204, 8
        %s1206 = scalar_lea.vmem %s6, %s1205
        // Predicated region
        $region94: #{stochastic_two_layer_rgcn.3} parent=80 // pred_check
          %p1207 = pneg %p195
        $region95: #{stochastic_two_layer_rgcn.3} parent=80 // pred_check_branch
          %1209 = sbr.rel (%p1207) target = $region97
        $region96: #{stochastic_two_layer_rgcn.3} parent=80 // pred_region
          %s1210 = smul.u32 16, %s21
        $region97: #{stochastic_two_layer_rgcn.3} parent=80 // pred_fallthru
          _
      $region81: #{stochastic_two_layer_rgcn.3} parent=5 // pred_fallthru
        _
      %p1211 = scmp.le.s32.totalorder 2, %s12
      // Predicated region
      $region98: #{stochastic_two_layer_rgcn.3} parent=5 // pred_check
        %p1212 = pneg %p1211
      $region99: #{stochastic_two_layer_rgcn.3} parent=5 // pred_check_branch
        %1214 = sbr.rel (%p1212) target = $region101
      $region100: #{stochastic_two_layer_rgcn.3} parent=5 // pred_region
        %s1215 = ssub.s32 %s12, 2
        // Predicated region
        $region102: #{stochastic_two_layer_rgcn.3} parent=100 // pred_check
          %p1216 = pneg %p201
        $region103: #{stochastic_two_layer_rgcn.3} parent=100 // pred_check_branch
          %1218 = sbr.rel (%p1216) target = $region105
        $region104: #{stochastic_two_layer_rgcn.3} parent=100 // pred_region
          %s1219 = smul.u32 16, %s23
          %p1220 = scmp.lt.s32.totalorder %s1219, 31
          %s1221 = scalar_select %p1220, %s1219, 31
          %s1222 = smul.addr %s1221, 8
          %s1223 = scalar_lea.vmem %s6, %s1222
        $region105: #{stochastic_two_layer_rgcn.3} parent=100 // pred_fallthru
          _
      $region101: #{stochastic_two_layer_rgcn.3} parent=5 // pred_fallthru
        _
    $region6: #{stochastic_two_layer_rgcn.3} parent=1 // loop_footer
      %s16 = sadd.s32 1, %s12
    $region7: #{stochastic_two_layer_rgcn.3} parent=1 // loop_footer_branch
      %11 = sbr.rel target = $region3
    $region8: #{stochastic_two_layer_rgcn.3} parent=1 // loop_exit
      _

// kernel: stochastic_two_layer_rgcn.2
$region0: #{stochastic_two_layer_rgcn.2}
  #allocation0 [shape = 'u32[]', space=smem, size = 0x4, offset = 0x4, fixed_abs, tag = 'smem constant byte address 0x4 - core index']
  #allocation1 [shape = 'u32[144,128]{1,0:T(1,128)}', space=vmem, size = 0x12000, scoped, tag = 'internal scratch']
  #allocation2 [shape = 'f32[128,128]{1,0:T(8,128)}', space=vmem, size = 0x10000, scoped, tag = 'scratch operand']
  %s0 = inlined_call_operand.vmem [shape: bf16[384,512], index: 0, kind: input, shape index: {}]
  %s1 = inlined_call_operand.vmem [shape: f32[512,128], index: 1, kind: input, shape index: {}]
  %s2 = inlined_call_operand.vmem [shape: f32[512,1], index: 2, kind: input, shape index: {}]
  %s3 = inlined_call_operand.vmem [shape: f32[384,1], index: 3, kind: input, shape index: {}]
  %s4 = inlined_call_operand.vmem [shape: bf16[128,128], index: 4, kind: input, shape index: {}]
  %s5 = inlined_call_operand.vmem [shape: f32[1,128], index: 5, kind: input, shape index: {}]
  %s6 = inlined_call_operand.vmem [shape: bf16[384,128], index: 6, kind: output, shape index: {}]
  %s7 = sld [smem:[#allocation0]]
  $region106: #{stochastic_two_layer_rgcn.2} parent=0
    _
  %s9 = ssub.s32 1, %s7
  %s10 = scalar_select 0, %s9, %s7
  $region1: #{stochastic_two_layer_rgcn.2} parent=0
    #allocation3 [shape = 'u8[65536]{0}', space=vmem, size = 0x10000, scoped, tag = 'input window, operand 0']
    loop: start=0, step=1, limit=14
    $region2: #{stochastic_two_layer_rgcn.2} parent=1 // loop_pre_header
      _
    $region3: #{stochastic_two_layer_rgcn.2} parent=1 // loop_header
      %s12 = sphi 0, %s16
      %p13 = scmp.ge.s32.totalorder %s12, 14
      %s19 = sphi 0, %s31
      %s20 = sphi 0, %s27
      %s21 = sphi 0, %s19
      %s22 = sphi 0, %s20
      %s23 = sphi 0, %s21
      %s24 = sphi 0, %s22
      %s36 = sphi 0, %s38
      %s39 = sphi 0, %s36
      %s40 = sphi 0, %s39
      %s56 = sphi 0, %s40
      %s62 = sphi 0, %s64
      %s65 = sphi 0, %s62
      %s66 = sphi 0, %s65
      %s82 = sphi 0, %s66
      %s88 = sphi 0, %s90
      %s91 = sphi 0, %s88
      %s92 = sphi 0, %s91
      %s108 = sphi 0, %s92
      %s114 = sphi 0, %s116
      %s117 = sphi 0, %s114
      %s118 = sphi 0, %s117
      %s134 = sphi 0, %s118
      %s138 = sphi 0, %s138
      %s140 = sphi 0, %s138
      %s141 = sphi 0, %s140
      %s155 = sphi 0, %s141
      %s159 = sphi 0, %s159
      %s161 = sphi 0, %s159
      %s162 = sphi 0, %s161
      %s176 = sphi 0, %s162
      %s182 = sphi 0, %s184
      %s185 = sphi 0, %s182
      %s186 = sphi 0, %s185
      %s202 = sphi 0, %s186
    $region4: #{stochastic_two_layer_rgcn.2} parent=1 // loop_header_branch
      %15 = sbr.rel (%p13) target = $region8
    $region5: #{stochastic_two_layer_rgcn.2} parent=1 // loop_body
      %s17 = ssub.s32 %s12, 1
      %s18 = ssub.s32 %s12, 2
      %s25 = sadd.s32 1, %s20
      %p26 = scmp.ge.s32.totalorder %s25, 4
      %s27 = scalar_select %p26, 0, %s25
      %s28 = sadd.s32 1, %s19
      %s29 = scalar_select %p26, %s28, %s19
      %p30 = scmp.ge.s32.totalorder %s29, 3
      %s31 = scalar_select %p30, 0, %s29
      %s32 = ssub.s32 %s19, %s31
      %s33 = ssub.s32 %s20, %s27
      %s34 = sor.u32 %s32, %s33
      %p35 = scmp.eq.s32.totalorder %s34, 0
      %s37 = sadd.s32 %s36, 1
      %s38 = scalar_select %p35, %s36, %s37
      %p41 = pneg %p35
      %p42 = scmp.eq.s32.totalorder %s12, 11
      %p43 = por %p41, %p42
      %p44 = scmp.ne.s32.totalorder %s36, %s39
      %p45 = scmp.eq.s32.totalorder %s12, 0
      %p46 = por %p44, %p45
      %p47 = scmp.ne.s32.totalorder %s36, %s39
      %p48 = scmp.eq.s32.totalorder %s17, 11
      %p49 = por %p47, %p48
      %p50 = scmp.ne.s32.totalorder %s39, %s40
      %p51 = scmp.eq.s32.totalorder %s17, 0
      %p52 = por %p50, %p51
      %p53 = scmp.ne.s32.totalorder %s39, %s40
      %p54 = scmp.eq.s32.totalorder %s18, 11
      %p55 = por %p53, %p54
      %p57 = scmp.ne.s32.totalorder %s40, %s56
      %p58 = scmp.eq.s32.totalorder %s18, 0
      %p59 = por %p57, %p58
      %s60 = ssub.s32 %s20, %s27
      %p61 = scmp.eq.s32.totalorder %s60, 0
      %s63 = sadd.s32 %s62, 1
      %s64 = scalar_select %p61, %s62, %s63
      %p67 = pneg %p61
      %p68 = scmp.eq.s32.totalorder %s12, 11
      %p69 = por %p67, %p68
      %p70 = scmp.ne.s32.totalorder %s62, %s65
      %p71 = scmp.eq.s32.totalorder %s12, 0
      %p72 = por %p70, %p71
      %p73 = scmp.ne.s32.totalorder %s62, %s65
      %p74 = scmp.eq.s32.totalorder %s17, 11
      %p75 = por %p73, %p74
      %p76 = scmp.ne.s32.totalorder %s65, %s66
      %p77 = scmp.eq.s32.totalorder %s17, 0
      %p78 = por %p76, %p77
      %p79 = scmp.ne.s32.totalorder %s65, %s66
      %p80 = scmp.eq.s32.totalorder %s18, 11
      %p81 = por %p79, %p80
      %p83 = scmp.ne.s32.totalorder %s66, %s82
      %p84 = scmp.eq.s32.totalorder %s18, 0
      %p85 = por %p83, %p84
      %s86 = ssub.s32 %s20, %s27
      %p87 = scmp.eq.s32.totalorder %s86, 0
      %s89 = sadd.s32 %s88, 1
      %s90 = scalar_select %p87, %s88, %s89
      %p93 = pneg %p87
      %p94 = scmp.eq.s32.totalorder %s12, 11
      %p95 = por %p93, %p94
      %p96 = scmp.ne.s32.totalorder %s88, %s91
      %p97 = scmp.eq.s32.totalorder %s12, 0
      %p98 = por %p96, %p97
      %p99 = scmp.ne.s32.totalorder %s88, %s91
      %p100 = scmp.eq.s32.totalorder %s17, 11
      %p101 = por %p99, %p100
      %p102 = scmp.ne.s32.totalorder %s91, %s92
      %p103 = scmp.eq.s32.totalorder %s17, 0
      %p104 = por %p102, %p103
      %p105 = scmp.ne.s32.totalorder %s91, %s92
      %p106 = scmp.eq.s32.totalorder %s18, 11
      %p107 = por %p105, %p106
      %p109 = scmp.ne.s32.totalorder %s92, %s108
      %p110 = scmp.eq.s32.totalorder %s18, 0
      %p111 = por %p109, %p110
      %s112 = ssub.s32 %s19, %s31
      %p113 = scmp.eq.s32.totalorder %s112, 0
      %s115 = sadd.s32 %s114, 1
      %s116 = scalar_select %p113, %s114, %s115
      %p119 = pneg %p113
      %p120 = scmp.eq.s32.totalorder %s12, 11
      %p121 = por %p119, %p120
      %p122 = scmp.ne.s32.totalorder %s114, %s117
      %p123 = scmp.eq.s32.totalorder %s12, 0
      %p124 = por %p122, %p123
      %p125 = scmp.ne.s32.totalorder %s114, %s117
      %p126 = scmp.eq.s32.totalorder %s17, 11
      %p127 = por %p125, %p126
      %p128 = scmp.ne.s32.totalorder %s117, %s118
      %p129 = scmp.eq.s32.totalorder %s17, 0
      %p130 = por %p128, %p129
      %p131 = scmp.ne.s32.totalorder %s117, %s118
      %p132 = scmp.eq.s32.totalorder %s18, 11
      %p133 = por %p131, %p132
      %p135 = scmp.ne.s32.totalorder %s118, %s134
      %p136 = scmp.eq.s32.totalorder %s18, 0
      %p137 = por %p135, %p136
      %s139 = sadd.s32 %s138, 1
      %p142 = scmp.eq.s32.totalorder %s12, 11
      %p143 = scmp.ne.s32.totalorder %s138, %s140
      %p144 = scmp.eq.s32.totalorder %s12, 0
      %p145 = por %p143, %p144
      %p146 = scmp.ne.s32.totalorder %s138, %s140
      %p147 = scmp.eq.s32.totalorder %s17, 11
      %p148 = por %p146, %p147
      %p149 = scmp.ne.s32.totalorder %s140, %s141
      %p150 = scmp.eq.s32.totalorder %s17, 0
      %p151 = por %p149, %p150
      %p152 = scmp.ne.s32.totalorder %s140, %s141
      %p153 = scmp.eq.s32.totalorder %s18, 11
      %p154 = por %p152, %p153
      %p156 = scmp.ne.s32.totalorder %s141, %s155
      %p157 = scmp.eq.s32.totalorder %s18, 0
      %p158 = por %p156, %p157
      %s160 = sadd.s32 %s159, 1
      %p163 = scmp.eq.s32.totalorder %s12, 11
      %p164 = scmp.ne.s32.totalorder %s159, %s161
      %p165 = scmp.eq.s32.totalorder %s12, 0
      %p166 = por %p164, %p165
      %p167 = scmp.ne.s32.totalorder %s159, %s161
      %p168 = scmp.eq.s32.totalorder %s17, 11
      %p169 = por %p167, %p168
      %p170 = scmp.ne.s32.totalorder %s161, %s162
      %p171 = scmp.eq.s32.totalorder %s17, 0
      %p172 = por %p170, %p171
      %p173 = scmp.ne.s32.totalorder %s161, %s162
      %p174 = scmp.eq.s32.totalorder %s18, 11
      %p175 = por %p173, %p174
      %p177 = scmp.ne.s32.totalorder %s162, %s176
      %p178 = scmp.eq.s32.totalorder %s18, 0
      %p179 = por %p177, %p178
      %s180 = ssub.s32 %s19, %s31
      %p181 = scmp.eq.s32.totalorder %s180, 0
      %s183 = sadd.s32 %s182, 1
      %s184 = scalar_select %p181, %s182, %s183
      %p187 = pneg %p181
      %p188 = scmp.eq.s32.totalorder %s12, 11
      %p189 = por %p187, %p188
      %p190 = scmp.ne.s32.totalorder %s182, %s185
      %p191 = scmp.eq.s32.totalorder %s12, 0
      %p192 = por %p190, %p191
      %p193 = scmp.ne.s32.totalorder %s182, %s185
      %p194 = scmp.eq.s32.totalorder %s17, 11
      %p195 = por %p193, %p194
      %p196 = scmp.ne.s32.totalorder %s185, %s186
      %p197 = scmp.eq.s32.totalorder %s17, 0
      %p198 = por %p196, %p197
      %p199 = scmp.ne.s32.totalorder %s185, %s186
      %p200 = scmp.eq.s32.totalorder %s18, 11
      %p201 = por %p199, %p200
      %p203 = scmp.ne.s32.totalorder %s186, %s202
      %p204 = scmp.eq.s32.totalorder %s18, 0
      %p205 = por %p203, %p204
      %p206 = scmp.le.s32.totalorder 1, %s12
      %p207 = scmp.lt.s32.totalorder %s12, 13
      %p208 = pnand %p206, %p207
      %p209 = pneg %p208
      // Predicated region
      $region9: #{stochastic_two_layer_rgcn.2} parent=5 // pred_check
        _
      $region10: #{stochastic_two_layer_rgcn.2} parent=5 // pred_check_branch
        %211 = sbr.rel (%p208) target = $region12
      $region11: #{stochastic_two_layer_rgcn.2} parent=5 // pred_region
        %s212 = ssub.s32 %s12, 1
        // Predicated region
        $region13: #{stochastic_two_layer_rgcn.2} parent=11 // pred_check
          %p213 = pneg %p151
        $region14: #{stochastic_two_layer_rgcn.2} parent=11 // pred_check_branch
          %215 = sbr.rel (%p213) target = $region16
        $region15: #{stochastic_two_layer_rgcn.2} parent=11 // pred_region
          _
        $region16: #{stochastic_two_layer_rgcn.2} parent=11 // pred_fallthru
          _
        // Predicated region
        $region17: #{stochastic_two_layer_rgcn.2} parent=11 // pred_check
          %p216 = pneg %p172
        $region18: #{stochastic_two_layer_rgcn.2} parent=11 // pred_check_branch
          %218 = sbr.rel (%p216) target = $region20
        $region19: #{stochastic_two_layer_rgcn.2} parent=11 // pred_region
          _
        $region20: #{stochastic_two_layer_rgcn.2} parent=11 // pred_fallthru
          _
      $region12: #{stochastic_two_layer_rgcn.2} parent=5 // pred_fallthru
        _
      %p219 = scmp.lt.s32.totalorder %s12, 12
      // Predicated region
      $region21: #{stochastic_two_layer_rgcn.2} parent=5 // pred_check
        %p220 = pneg %p219
      $region22: #{stochastic_two_layer_rgcn.2} parent=5 // pred_check_branch
        %222 = sbr.rel (%p220) target = $region24
      $region23: #{stochastic_two_layer_rgcn.2} parent=5 // pred_region
        // Predicated region
        $region25: #{stochastic_two_layer_rgcn.2} parent=23 // pred_check
          %p223 = pneg %p46
        $region26: #{stochastic_two_layer_rgcn.2} parent=23 // pred_check_branch
          %225 = sbr.rel (%p223) target = $region28
        $region27: #{stochastic_two_layer_rgcn.2} parent=23 // pred_region
          %s226 = sand.u32 %s36, 1
          %s227 = sand.u32 %s36, 1
          %s228 = smul.addr %s227, 64
          %s229 = scalar_lea.vmem [#allocation3], %s228
          %s230 = smul.u32 16, %s19
          %s231 = smul.addr %s230, 4
          %s232 = sadd.s32 %s20, %s231
          %s233 = smul.addr %s232, 4
          %s234 = scalar_lea.vmem %s0, %s233
          // Predicated region
          $region29: #{stochastic_two_layer_rgcn.2} parent=27 // pred_check
            _
          $region30: #{stochastic_two_layer_rgcn.2} parent=27 // pred_check_branch
            %236 = sbr.rel (0) target = $region32
          $region31: #{stochastic_two_layer_rgcn.2} parent=27 // pred_region
            // Predicated region
            $region33: #{stochastic_two_layer_rgcn.2} parent=31 // pred_check
              _
            $region34: #{stochastic_two_layer_rgcn.2} parent=31 // pred_check_branch
              %238 = sbr.rel target = $region36
            $region35: #{stochastic_two_layer_rgcn.2} parent=31 // pred_region
              // Predicated region
              $region48: #{stochastic_two_layer_rgcn.2} parent=35 // pred_check
                _
              $region49: #{stochastic_two_layer_rgcn.2} parent=35 // pred_check_branch
                %284 = sbr.rel (0) target = $region51
              $region50: #{stochastic_two_layer_rgcn.2} parent=35 // pred_region
                loop: start=0, step=1, limit=1
                $region52: #{stochastic_two_layer_rgcn.2} parent=50 // loop_pre_header
                  _
                $region53: #{stochastic_two_layer_rgcn.2} parent=50 // loop_header
                  %s286 = sphi 0, %s290
                  %p287 = scmp.ge.s32.totalorder %s286, 1
                  %s291 = sphi %s234, %s234
                  %s292 = sphi %s229, %s229
                $region54: #{stochastic_two_layer_rgcn.2} parent=50 // loop_header_branch
                  %289 = sbr.rel (%p287) target = $region58
                $region55: #{stochastic_two_layer_rgcn.2} parent=50 // loop_body
                  _
                $region56: #{stochastic_two_layer_rgcn.2} parent=50 // loop_footer
                  %s290 = sadd.s32 1, %s286
                $region57: #{stochastic_two_layer_rgcn.2} parent=50 // loop_footer_branch
                  %285 = sbr.rel target = $region53
                $region58: #{stochastic_two_layer_rgcn.2} parent=50 // loop_exit
                  _
                %s294 = ssub.s32 16, 1
                loop: start=0, step=1, limit=1
                $region59: #{stochastic_two_layer_rgcn.2} parent=50 // loop_pre_header
                  _
                $region60: #{stochastic_two_layer_rgcn.2} parent=50 // loop_header
                  %s296 = sphi 0, %s300
                  %p297 = scmp.ge.s32.totalorder %s296, 1
                  %s301 = sphi %s234, %s234
                  %s302 = sphi %s229, %s229
                $region61: #{stochastic_two_layer_rgcn.2} parent=50 // loop_header_branch
                  %299 = sbr.rel (%p297) target = $region65
                $region62: #{stochastic_two_layer_rgcn.2} parent=50 // loop_body
                  %v303 = vld [vmem:[%s301] sm:%s294]
                  %304 = vst [vmem:[%s302] sm:%s294] %v303
                  %v305 = vld [vmem:[%s301 + $0x10] sm:%s294]
                  %306 = vst [vmem:[%s302 + $0x4] sm:%s294] %v305
                  %v307 = vld [vmem:[%s301 + $0x20] sm:%s294]
                  %308 = vst [vmem:[%s302 + $0x8] sm:%s294] %v307
                  %v309 = vld [vmem:[%s301 + $0x30] sm:%s294]
                  %310 = vst [vmem:[%s302 + $0xc] sm:%s294] %v309
                  %v311 = vld [vmem:[%s301 + $0x40] sm:%s294]
                  %312 = vst [vmem:[%s302 + $0x10] sm:%s294] %v311
                  %v313 = vld [vmem:[%s301 + $0x50] sm:%s294]
                  %314 = vst [vmem:[%s302 + $0x14] sm:%s294] %v313
                  %v315 = vld [vmem:[%s301 + $0x60] sm:%s294]
                  %316 = vst [vmem:[%s302 + $0x18] sm:%s294] %v315
                  %v317 = vld [vmem:[%s301 + $0x70] sm:%s294]
                  %318 = vst [vmem:[%s302 + $0x1c] sm:%s294] %v317
                  %v319 = vld [vmem:[%s301 + $0x80] sm:%s294]
                  %320 = vst [vmem:[%s302 + $0x20] sm:%s294] %v319
                  %v321 = vld [vmem:[%s301 + $0x90] sm:%s294]
                  %322 = vst [vmem:[%s302 + $0x24] sm:%s294] %v321
                  %v323 = vld [vmem:[%s301 + $0xa0] sm:%s294]
                  %324 = vst [vmem:[%s302 + $0x28] sm:%s294] %v323
                  %v325 = vld [vmem:[%s301 + $0xb0] sm:%s294]
                  %326 = vst [vmem:[%s302 + $0x2c] sm:%s294] %v325
                  %v327 = vld [vmem:[%s301 + $0xc0] sm:%s294]
                  %328 = vst [vmem:[%s302 + $0x30] sm:%s294] %v327
                  %v329 = vld [vmem:[%s301 + $0xd0] sm:%s294]
                  %330 = vst [vmem:[%s302 + $0x34] sm:%s294] %v329
                  %v331 = vld [vmem:[%s301 + $0xe0] sm:%s294]
                  %332 = vst [vmem:[%s302 + $0x38] sm:%s294] %v331
                  %v333 = vld [vmem:[%s301 + $0xf0] sm:%s294]
                  %334 = vst [vmem:[%s302 + $0x3c] sm:%s294] %v333
                $region63: #{stochastic_two_layer_rgcn.2} parent=50 // loop_footer
                  %s300 = sadd.s32 1, %s296
                $region64: #{stochastic_two_layer_rgcn.2} parent=50 // loop_footer_branch
                  %295 = sbr.rel target = $region60
                $region65: #{stochastic_two_layer_rgcn.2} parent=50 // loop_exit
                  _
              $region51: #{stochastic_two_layer_rgcn.2} parent=35 // pred_fallthru
                _
            $region36: #{stochastic_two_layer_rgcn.2} parent=31 // pred_fallthru
              _
            // Predicated region
            $region37: #{stochastic_two_layer_rgcn.2} parent=31 // pred_check
              _
            $region38: #{stochastic_two_layer_rgcn.2} parent=31 // pred_check_branch
              %240 = sbr.rel (0) target = $region40
            $region39: #{stochastic_two_layer_rgcn.2} parent=31 // pred_region
              %s242 = ssub.s32 16, 1
              loop: start=0, step=1, limit=1
              $region41: #{stochastic_two_layer_rgcn.2} parent=39 // loop_pre_header
                _
              $region42: #{stochastic_two_layer_rgcn.2} parent=39 // loop_header
                %s244 = sphi 0, %s248
                %p245 = scmp.ge.s32.totalorder %s244, 1
                %s249 = sphi %s234, %s234
                %s250 = sphi %s229, %s229
              $region43: #{stochastic_two_layer_rgcn.2} parent=39 // loop_header_branch
                %247 = sbr.rel (%p245) target = $region47
              $region44: #{stochastic_two_layer_rgcn.2} parent=39 // loop_body
                %v251 = vld [vmem:[%s249] sm:%s242]
                %252 = vst [vmem:[%s250] sm:%s242] %v251
                %v253 = vld [vmem:[%s249 + $0x10] sm:%s242]
                %254 = vst [vmem:[%s250 + $0x4] sm:%s242] %v253
                %v255 = vld [vmem:[%s249 + $0x20] sm:%s242]
                %256 = vst [vmem:[%s250 + $0x8] sm:%s242] %v255
                %v257 = vld [vmem:[%s249 + $0x30] sm:%s242]
                %258 = vst [vmem:[%s250 + $0xc] sm:%s242] %v257
                %v259 = vld [vmem:[%s249 + $0x40] sm:%s242]
                %260 = vst [vmem:[%s250 + $0x10] sm:%s242] %v259
                %v261 = vld [vmem:[%s249 + $0x50] sm:%s242]
                %262 = vst [vmem:[%s250 + $0x14] sm:%s242] %v261
                %v263 = vld [vmem:[%s249 + $0x60] sm:%s242]
                %264 = vst [vmem:[%s250 + $0x18] sm:%s242] %v263
                %v265 = vld [vmem:[%s249 + $0x70] sm:%s242]
                %266 = vst [vmem:[%s250 + $0x1c] sm:%s242] %v265
                %v267 = vld [vmem:[%s249 + $0x80] sm:%s242]
                %268 = vst [vmem:[%s250 + $0x20] sm:%s242] %v267
                %v269 = vld [vmem:[%s249 + $0x90] sm:%s242]
                %270 = vst [vmem:[%s250 + $0x24] sm:%s242] %v269
                %v271 = vld [vmem:[%s249 + $0xa0] sm:%s242]
                %272 = vst [vmem:[%s250 + $0x28] sm:%s242] %v271
                %v273 = vld [vmem:[%s249 + $0xb0] sm:%s242]
                %274 = vst [vmem:[%s250 + $0x2c] sm:%s242] %v273
                %v275 = vld [vmem:[%s249 + $0xc0] sm:%s242]
                %276 = vst [vmem:[%s250 + $0x30] sm:%s242] %v275
                %v277 = vld [vmem:[%s249 + $0xd0] sm:%s242]
                %278 = vst [vmem:[%s250 + $0x34] sm:%s242] %v277
                %v279 = vld [vmem:[%s249 + $0xe0] sm:%s242]
                %280 = vst [vmem:[%s250 + $0x38] sm:%s242] %v279
                %v281 = vld [vmem:[%s249 + $0xf0] sm:%s242]
                %282 = vst [vmem:[%s250 + $0x3c] sm:%s242] %v281
              $region45: #{stochastic_two_layer_rgcn.2} parent=39 // loop_footer
                %s248 = sadd.s32 1, %s244
              $region46: #{stochastic_two_layer_rgcn.2} parent=39 // loop_footer_branch
                %243 = sbr.rel target = $region42
              $region47: #{stochastic_two_layer_rgcn.2} parent=39 // loop_exit
                _
            $region40: #{stochastic_two_layer_rgcn.2} parent=31 // pred_fallthru
              _
          $region32: #{stochastic_two_layer_rgcn.2} parent=27 // pred_fallthru
            _
          %335 = vnop
        $region28: #{stochastic_two_layer_rgcn.2} parent=23 // pred_fallthru
          _
        // Predicated region
        $region66: #{stochastic_two_layer_rgcn.2} parent=23 // pred_check
          %p336 = pneg %p72
        $region67: #{stochastic_two_layer_rgcn.2} parent=23 // pred_check_branch
          %338 = sbr.rel (%p336) target = $region69
        $region68: #{stochastic_two_layer_rgcn.2} parent=23 // pred_region
          %s339 = smul.u32 16, %s20
          %p340 = scmp.lt.s32.totalorder %s339, 63
          %s341 = scalar_select %p340, %s339, 63
          %s342 = smul.addr %s341, 8
          %s343 = scalar_lea.vmem %s1, %s342
          %s344 = smul.u32 16, %s20
        $region69: #{stochastic_two_layer_rgcn.2} parent=23 // pred_fallthru
          _
        // Predicated region
        $region70: #{stochastic_two_layer_rgcn.2} parent=23 // pred_check
          %p345 = pneg %p98
        $region71: #{stochastic_two_layer_rgcn.2} parent=23 // pred_check_branch
          %347 = sbr.rel (%p345) target = $region73
        $region72: #{stochastic_two_layer_rgcn.2} parent=23 // pred_region
          %s348 = smul.u32 16, %s20
          %p349 = scmp.lt.s32.totalorder %s348, 63
          %s350 = scalar_select %p349, %s348, 63
          %s351 = smul.addr %s350, 8
          %s352 = scalar_lea.vmem %s2, %s351
          %s353 = smul.u32 16, %s20
        $region73: #{stochastic_two_layer_rgcn.2} parent=23 // pred_fallthru
          _
        // Predicated region
        $region74: #{stochastic_two_layer_rgcn.2} parent=23 // pred_check
          %p354 = pneg %p124
        $region75: #{stochastic_two_layer_rgcn.2} parent=23 // pred_check_branch
          %356 = sbr.rel (%p354) target = $region77
        $region76: #{stochastic_two_layer_rgcn.2} parent=23 // pred_region
          %s357 = smul.u32 16, %s19
          %p358 = scmp.lt.s32.totalorder %s357, 47
          %s359 = scalar_select %p358, %s357, 47
          %s360 = smul.addr %s359, 8
          %s361 = scalar_lea.vmem %s3, %s360
          %s362 = smul.u32 16, %s19
        $region77: #{stochastic_two_layer_rgcn.2} parent=23 // pred_fallthru
          _
      $region24: #{stochastic_two_layer_rgcn.2} parent=5 // pred_fallthru
        _
      %p363 = scmp.le.s32.totalorder 1, %s12
      %p364 = scmp.lt.s32.totalorder %s12, 13
      %p365 = pnand %p363, %p364
      %p366 = pneg %p365
      // Predicated region
      $region78: #{stochastic_two_layer_rgcn.2} parent=5 // pred_check
        _
      $region79: #{stochastic_two_layer_rgcn.2} parent=5 // pred_check_branch
        %368 = sbr.rel (%p365) target = $region81
      $region80: #{stochastic_two_layer_rgcn.2} parent=5 // pred_region
        %s369 = ssub.s32 %s12, 1
        %s370 = sand.u32 %s39, 1
        %s371 = sand.u32 %s39, 1
        %s372 = smul.addr %s371, 64
        %s373 = scalar_lea.vmem [#allocation3], %s372
        // Predicated region
        $region82: #{stochastic_two_layer_rgcn.2} parent=80 // pred_check
          %p374 = pneg %p52
        $region83: #{stochastic_two_layer_rgcn.2} parent=80 // pred_check_branch
          %376 = sbr.rel (%p374) target = $region85
        $region84: #{stochastic_two_layer_rgcn.2} parent=80 // pred_region
          _
        $region85: #{stochastic_two_layer_rgcn.2} parent=80 // pred_fallthru
          _
        %s377 = sand.u32 %s39, 1
        %s378 = sand.u32 %s39, 1
        %s379 = smul.addr %s378, 64
        %s380 = scalar_lea.vmem [#allocation3], %s379
        %p381 = pneg %p52
        %p382 = pneg %p49
        %s383 = smul.u32 16, %s22
        %p384 = scmp.lt.s32.totalorder %s383, 63
        %s385 = scalar_select %p384, %s383, 63
        %s386 = smul.addr %s385, 8
        %s387 = scalar_lea.vmem %s1, %s386
        %p388 = pneg %p78
        %p389 = pneg %p75
        %s390 = smul.u32 16, %s22
        %p391 = scmp.lt.s32.totalorder %s390, 63
        %s392 = scalar_select %p391, %s390, 63
        %s393 = smul.addr %s392, 8
        %s394 = scalar_lea.vmem %s2, %s393
        %p395 = pneg %p104
        %p396 = pneg %p101
        %s397 = smul.u32 16, %s21
        %p398 = scmp.lt.s32.totalorder %s397, 47
        %s399 = scalar_select %p398, %s397, 47
        %s400 = smul.addr %s399, 8
        %s401 = scalar_lea.vmem %s3, %s400
        %p402 = pneg %p130
        %p403 = pneg %p127
        %p404 = pneg %p151
        %p405 = pneg %p148
        %p406 = pneg %p172
        %p407 = pneg %p169
        %p408 = pneg %p198
        %p409 = pneg %p195
        %s410 = smul.u32 16, %s21
        %p411 = scmp.lt.s32.totalorder %s410, 47
        %s412 = scalar_select %p411, %s410, 47
        %s413 = smul.addr %s412, 4
        %s414 = scalar_lea.vmem %s6, %s413
        %s415 = smul.u32 16, %s21
        %s416 = smul.u32 16, %s22
        %p417 = scmp.lt.s32.totalorder %s416, 63
        %s418 = scalar_select %p417, %s416, 63
        %s419 = smul.addr %s418, 8
        %s420 = scalar_lea.vmem %s1, %s419
        %s421 = smul.u32 16, %s22
        %s422 = smul.u32 16, %s22
        %p423 = scmp.lt.s32.totalorder %s422, 63
        %s424 = scalar_select %p423, %s422, 63
        %s425 = smul.addr %s424, 8
        %s426 = scalar_lea.vmem %s2, %s425
        %s427 = smul.u32 16, %s22
        %s428 = smul.u32 16, %s21
        %p429 = scmp.lt.s32.totalorder %s428, 47
        %s430 = scalar_select %p429, %s428, 47
        %s431 = smul.addr %s430, 8
        %s432 = scalar_lea.vmem %s3, %s431
        %s433 = smul.u32 16, %s21
        %s434 = smul.u32 16, %s21
        %p435 = scmp.lt.s32.totalorder %s434, 47
        %s436 = scalar_select %p435, %s434, 47
        %s437 = smul.addr %s436, 4
        %s438 = scalar_lea.vmem %s6, %s437
        %s439 = smul.u32 16, %s21
        %p441 = scmp.eq.s32.totalorder %s22, 0
        // Predicated region
        $region86: #{stochastic_two_layer_rgcn.2} parent=80 // pred_check
          %p442 = pneg %p441
        $region87: #{stochastic_two_layer_rgcn.2} parent=80 // pred_check_branch
          %444 = sbr.rel (%p442) target = $region89
        $region88: #{stochastic_two_layer_rgcn.2} parent=80 // pred_region
          %445 = vst [vmem:[#allocation2] sm:$0xff] 0.0
          %446 = vst [vmem:[#allocation2 + $0x8] sm:$0xff] 0.0
          %447 = vst [vmem:[#allocation2 + $0x10] sm:$0xff] 0.0
          %448 = vst [vmem:[#allocation2 + $0x18] sm:$0xff] 0.0
          %449 = vst [vmem:[#allocation2 + $0x20] sm:$0xff] 0.0
          %450 = vst [vmem:[#allocation2 + $0x28] sm:$0xff] 0.0
          %451 = vst [vmem:[#allocation2 + $0x30] sm:$0xff] 0.0
          %452 = vst [vmem:[#allocation2 + $0x38] sm:$0xff] 0.0
          %453 = vst [vmem:[#allocation2 + $0x40] sm:$0xff] 0.0
          %454 = vst [vmem:[#allocation2 + $0x48] sm:$0xff] 0.0
          %455 = vst [vmem:[#allocation2 + $0x50] sm:$0xff] 0.0
          %456 = vst [vmem:[#allocation2 + $0x58] sm:$0xff] 0.0
          %457 = vst [vmem:[#allocation2 + $0x60] sm:$0xff] 0.0
          %458 = vst [vmem:[#allocation2 + $0x68] sm:$0xff] 0.0
          %459 = vst [vmem:[#allocation2 + $0x70] sm:$0xff] 0.0
          %460 = vst [vmem:[#allocation2 + $0x78] sm:$0xff] 0.0
        $region89: #{stochastic_two_layer_rgcn.2} parent=80 // pred_fallthru
          _
        %v461 = vld [vmem:[%s420] sm:$0xff]
        %v462 = vld [vmem:[%s420 + $0x8] sm:$0xff]
        %v463 = vld [vmem:[%s420 + $0x10] sm:$0xff]
        %v464 = vld [vmem:[%s420 + $0x18] sm:$0xff]
        %v465 = vld [vmem:[%s420 + $0x20] sm:$0xff]
        %v466 = vld [vmem:[%s420 + $0x28] sm:$0xff]
        %v467 = vld [vmem:[%s420 + $0x30] sm:$0xff]
        %v468 = vld [vmem:[%s420 + $0x38] sm:$0xff]
        %v469 = vld [vmem:[%s420 + $0x40] sm:$0xff]
        %v470 = vld [vmem:[%s420 + $0x48] sm:$0xff]
        %v471 = vld [vmem:[%s420 + $0x50] sm:$0xff]
        %v472 = vld [vmem:[%s420 + $0x58] sm:$0xff]
        %v473 = vld [vmem:[%s420 + $0x60] sm:$0xff]
        %v474 = vld [vmem:[%s420 + $0x68] sm:$0xff]
        %v475 = vld [vmem:[%s420 + $0x70] sm:$0xff]
        %v476 = vld [vmem:[%s420 + $0x78] sm:$0xff]
        %v477 = vld [vmem:[%s426] sm:$0xff]
        %v478 = vld [vmem:[%s426 + $0x8] sm:$0xff]
        %v479 = vld [vmem:[%s426 + $0x10] sm:$0xff]
        %v480 = vld [vmem:[%s426 + $0x18] sm:$0xff]
        %v481 = vld [vmem:[%s426 + $0x20] sm:$0xff]
        %v482 = vld [vmem:[%s426 + $0x28] sm:$0xff]
        %v483 = vld [vmem:[%s426 + $0x30] sm:$0xff]
        %v484 = vld [vmem:[%s426 + $0x38] sm:$0xff]
        %v485 = vld [vmem:[%s426 + $0x40] sm:$0xff]
        %v486 = vld [vmem:[%s426 + $0x48] sm:$0xff]
        %v487 = vld [vmem:[%s426 + $0x50] sm:$0xff]
        %v488 = vld [vmem:[%s426 + $0x58] sm:$0xff]
        %v489 = vld [vmem:[%s426 + $0x60] sm:$0xff]
        %v490 = vld [vmem:[%s426 + $0x68] sm:$0xff]
        %v491 = vld [vmem:[%s426 + $0x70] sm:$0xff]
        %v492 = vld [vmem:[%s426 + $0x78] sm:$0xff]
        %494 = vset.pattern.permute.xlu0 0
        %495 = vperm.xlu0 %494, %v477
        %v496 = vpop.permute.xlu0 %495
        %499 = vset.pattern.permute.xlu0 0
        %500 = vperm.xlu0 %499, %v478
        %v501 = vpop.permute.xlu0 %500
        %504 = vset.pattern.permute.xlu0 0
        %505 = vperm.xlu0 %504, %v479
        %v506 = vpop.permute.xlu0 %505
        %509 = vset.pattern.permute.xlu0 0
        %510 = vperm.xlu0 %509, %v480
        %v511 = vpop.permute.xlu0 %510
        %514 = vset.pattern.permute.xlu0 0
        %515 = vperm.xlu0 %514, %v481
        %v516 = vpop.permute.xlu0 %515
        %519 = vset.pattern.permute.xlu0 0
        %520 = vperm.xlu0 %519, %v482
        %v521 = vpop.permute.xlu0 %520
        %524 = vset.pattern.permute.xlu0 0
        %525 = vperm.xlu0 %524, %v483
        %v526 = vpop.permute.xlu0 %525
        %529 = vset.pattern.permute.xlu0 0
        %530 = vperm.xlu0 %529, %v484
        %v531 = vpop.permute.xlu0 %530
        %534 = vset.pattern.permute.xlu0 0
        %535 = vperm.xlu0 %534, %v485
        %v536 = vpop.permute.xlu0 %535
        %539 = vset.pattern.permute.xlu0 0
        %540 = vperm.xlu0 %539, %v486
        %v541 = vpop.permute.xlu0 %540
        %544 = vset.pattern.permute.xlu0 0
        %545 = vperm.xlu0 %544, %v487
        %v546 = vpop.permute.xlu0 %545
        %549 = vset.pattern.permute.xlu0 0
        %550 = vperm.xlu0 %549, %v488
        %v551 = vpop.permute.xlu0 %550
        %554 = vset.pattern.permute.xlu0 0
        %555 = vperm.xlu0 %554, %v489
        %v556 = vpop.permute.xlu0 %555
        %559 = vset.pattern.permute.xlu0 0
        %560 = vperm.xlu0 %559, %v490
        %v561 = vpop.permute.xlu0 %560
        %564 = vset.pattern.permute.xlu0 0
        %565 = vperm.xlu0 %564, %v491
        %v566 = vpop.permute.xlu0 %565
        %569 = vset.pattern.permute.xlu0 0
        %570 = vperm.xlu0 %569, %v492
        %v571 = vpop.permute.xlu0 %570
        %v573 = vmul.f32 %v461, %v496
        %v574 = vmul.f32 %v462, %v501
        %v575 = vmul.f32 %v463, %v506
        %v576 = vmul.f32 %v464, %v511
        %v577 = vmul.f32 %v465, %v516
        %v578 = vmul.f32 %v466, %v521
        %v579 = vmul.f32 %v467, %v526
        %v580 = vmul.f32 %v468, %v531
        %v581 = vmul.f32 %v469, %v536
        %v582 = vmul.f32 %v470, %v541
        %v583 = vmul.f32 %v471, %v546
        %v584 = vmul.f32 %v472, %v551
        %v585 = vmul.f32 %v473, %v556
        %v586 = vmul.f32 %v474, %v561
        %v587 = vmul.f32 %v475, %v566
        %v588 = vmul.f32 %v476, %v571
        %v589 = vpack.c.bf16 %v574, %v573
        %v590 = vpack.c.bf16 %v576, %v575
        %v591 = vpack.c.bf16 %v578, %v577
        %v592 = vpack.c.bf16 %v580, %v579
        %v593 = vpack.c.bf16 %v582, %v581
        %v594 = vpack.c.bf16 %v584, %v583
        %v595 = vpack.c.bf16 %v586, %v585
        %v596 = vpack.c.bf16 %v588, %v587
        %v597 = vld [vmem:[#allocation2] sm:$0xff]
        %v598 = vld [vmem:[#allocation2 + $0x8] sm:$0xff]
        %v599 = vld [vmem:[#allocation2 + $0x10] sm:$0xff]
        %v600 = vld [vmem:[#allocation2 + $0x18] sm:$0xff]
        %v601 = vld [vmem:[#allocation2 + $0x20] sm:$0xff]
        %v602 = vld [vmem:[#allocation2 + $0x28] sm:$0xff]
        %v603 = vld [vmem:[#allocation2 + $0x30] sm:$0xff]
        %v604 = vld [vmem:[#allocation2 + $0x38] sm:$0xff]
        %v605 = vld [vmem:[#allocation2 + $0x40] sm:$0xff]
        %v606 = vld [vmem:[#allocation2 + $0x48] sm:$0xff]
        %v607 = vld [vmem:[#allocation2 + $0x50] sm:$0xff]
        %v608 = vld [vmem:[#allocation2 + $0x58] sm:$0xff]
        %v609 = vld [vmem:[#allocation2 + $0x60] sm:$0xff]
        %v610 = vld [vmem:[#allocation2 + $0x68] sm:$0xff]
        %v611 = vld [vmem:[#allocation2 + $0x70] sm:$0xff]
        %v612 = vld [vmem:[#allocation2 + $0x78] sm:$0xff]
        %v613 = vld [vmem:[%s373] sm:$0xf]
        %v614 = vld [vmem:[%s373 + $0x4] sm:$0xf]
        %v615 = vld [vmem:[%s373 + $0x8] sm:$0xf]
        %v616 = vld [vmem:[%s373 + $0xc] sm:$0xf]
        %v617 = vld [vmem:[%s373 + $0x10] sm:$0xf]
        %v618 = vld [vmem:[%s373 + $0x14] sm:$0xf]
        %v619 = vld [vmem:[%s373 + $0x18] sm:$0xf]
        %v620 = vld [vmem:[%s373 + $0x1c] sm:$0xf]
        %v621 = vld [vmem:[%s373 + $0x20] sm:$0xf]
        %v622 = vld [vmem:[%s373 + $0x24] sm:$0xf]
        %v623 = vld [vmem:[%s373 + $0x28] sm:$0xf]
        %v624 = vld [vmem:[%s373 + $0x2c] sm:$0xf]
        %v625 = vld [vmem:[%s373 + $0x30] sm:$0xf]
        %v626 = vld [vmem:[%s373 + $0x34] sm:$0xf]
        %v627 = vld [vmem:[%s373 + $0x38] sm:$0xf]
        %v628 = vld [vmem:[%s373 + $0x3c] sm:$0xf]
        %v645 = vunpack.c.l.b16 %v613
        %v646 = vunpack.c.l.b16 %v614
        %v647 = vunpack.c.l.b16 %v615
        %v648 = vunpack.c.l.b16 %v616
        %v649 = vunpack.c.l.b16 %v617
        %v650 = vunpack.c.l.b16 %v618
        %v651 = vunpack.c.l.b16 %v619
        %v652 = vunpack.c.l.b16 %v620
        %v653 = vunpack.c.l.b16 %v621
        %v654 = vunpack.c.l.b16 %v622
        %v655 = vunpack.c.l.b16 %v623
        %v656 = vunpack.c.l.b16 %v624
        %v657 = vunpack.c.l.b16 %v625
        %v658 = vunpack.c.l.b16 %v626
        %v659 = vunpack.c.l.b16 %v627
        %v660 = vunpack.c.l.b16 %v628
        %v661 = vpack.c.b16 %v646, %v645
        %v662 = vpack.c.b16 %v648, %v647
        %v663 = vpack.c.b16 %v650, %v649
        %v664 = vpack.c.b16 %v652, %v651
        %v665 = vpack.c.b16 %v654, %v653
        %v666 = vpack.c.b16 %v656, %v655
        %v667 = vpack.c.b16 %v658, %v657
        %v668 = vpack.c.b16 %v660, %v659
        %677 = vmatprep.subr.bf16.mxu0 0
        %678 = vmatpush1.bf16.msra.mxu0 %v596
        %679 = vmatprep.subr.bf16.mxu0 0
        %680 = vmatpush1.bf16.msra.mxu0 %v595
        %681 = vmatprep.subr.bf16.mxu0 0
        %682 = vmatpush1.bf16.msra.mxu0 %v594
        %683 = vmatprep.subr.bf16.mxu0 0
        %684 = vmatpush1.bf16.msra.mxu0 %v593
        %685 = vmatprep.subr.bf16.mxu0 0
        %686 = vmatpush1.bf16.msra.mxu0 %v592
        %687 = vmatprep.subr.bf16.mxu0 0
        %688 = vmatpush1.bf16.msra.mxu0 %v591
        %689 = vmatprep.subr.bf16.mxu0 0
        %690 = vmatpush1.bf16.msra.mxu0 %v590
        %691 = vmatprep.subr.bf16.mxu0 0
        %692 = vmatpush1.bf16.msra.mxu0 %v589
        %693 = vmatprep.subr.bf16.mxu0 0
        %694 = vmatpush2.bf16.msra.mxu0 0
        %695 = vmatprep.subr.bf16.mxu0 0
        %696 = vmatpush2.bf16.msra.mxu0 0
        %697 = vmatprep.subr.bf16.mxu0 0
        %698 = vmatpush2.bf16.msra.mxu0 0
        %699 = vmatprep.subr.bf16.mxu0 0
        %700 = vmatpush2.bf16.msra.mxu0 0
        %701 = vmatprep.subr.bf16.mxu0 0
        %702 = vmatpush2.bf16.msra.mxu0 0
        %703 = vmatprep.subr.bf16.mxu0 0
        %704 = vmatpush2.bf16.msra.mxu0 0
        %705 = vmatprep.subr.bf16.mxu0 0
        %706 = vmatpush2.bf16.msra.mxu0 0
        %707 = vmatprep.subr.bf16.mxu0 0
        %708 = vmatpush2.bf16.msra.mxu0 0
        %709 = vmatprep.mubr.bf16.mxu0 0
        %710 = vmatmul.mubr.bf16.gmra.mxu0 %v661
        %v711 = vpop.f32.mrf.mxu0
        %v712 = vadd.f32 0.0, %v711
        %v713 = vpop.f32.mrf.mxu0
        %v714 = vpop.f32.mrf.mxu0
        %v715 = vadd.f32 0.0, %v714
        %v716 = vpop.f32.mrf.mxu0
        %717 = vmatprep.mubr.bf16.mxu0 0
        %718 = vmatmul.mubr.bf16.gmra.mxu0 %v662
        %v719 = vpop.f32.mrf.mxu0
        %v720 = vadd.f32 0.0, %v719
        %v721 = vpop.f32.mrf.mxu0
        %v722 = vpop.f32.mrf.mxu0
        %v723 = vadd.f32 0.0, %v722
        %v724 = vpop.f32.mrf.mxu0
        %725 = vmatprep.mubr.bf16.mxu0 0
        %726 = vmatmul.mubr.bf16.gmra.mxu0 %v663
        %v727 = vpop.f32.mrf.mxu0
        %v728 = vadd.f32 0.0, %v727
        %v729 = vpop.f32.mrf.mxu0
        %v730 = vpop.f32.mrf.mxu0
        %v731 = vadd.f32 0.0, %v730
        %v732 = vpop.f32.mrf.mxu0
        %733 = vmatprep.mubr.bf16.mxu0 0
        %734 = vmatmul.mubr.bf16.gmra.mxu0 %v664
        %v735 = vpop.f32.mrf.mxu0
        %v736 = vadd.f32 0.0, %v735
        %v737 = vpop.f32.mrf.mxu0
        %v738 = vpop.f32.mrf.mxu0
        %v739 = vadd.f32 0.0, %v738
        %v740 = vpop.f32.mrf.mxu0
        %741 = vmatprep.mubr.bf16.mxu0 0
        %742 = vmatmul.mubr.bf16.gmra.mxu0 %v665
        %v743 = vpop.f32.mrf.mxu0
        %v744 = vadd.f32 0.0, %v743
        %v745 = vpop.f32.mrf.mxu0
        %v746 = vpop.f32.mrf.mxu0
        %v747 = vadd.f32 0.0, %v746
        %v748 = vpop.f32.mrf.mxu0
        %749 = vmatprep.mubr.bf16.mxu0 0
        %750 = vmatmul.mubr.bf16.gmra.mxu0 %v666
        %v751 = vpop.f32.mrf.mxu0
        %v752 = vadd.f32 0.0, %v751
        %v753 = vpop.f32.mrf.mxu0
        %v754 = vpop.f32.mrf.mxu0
        %v755 = vadd.f32 0.0, %v754
        %v756 = vpop.f32.mrf.mxu0
        %757 = vmatprep.mubr.bf16.mxu0 0
        %758 = vmatmul.mubr.bf16.gmra.mxu0 %v667
        %v759 = vpop.f32.mrf.mxu0
        %v760 = vadd.f32 0.0, %v759
        %v761 = vpop.f32.mrf.mxu0
        %v762 = vpop.f32.mrf.mxu0
        %v763 = vadd.f32 0.0, %v762
        %v764 = vpop.f32.mrf.mxu0
        %765 = vmatprep.mubr.bf16.mxu0 0
        %766 = vmatmul.mubr.bf16.gmra.mxu0 %v668
        %v767 = vpop.f32.mrf.mxu0
        %v768 = vadd.f32 0.0, %v767
        %v769 = vpop.f32.mrf.mxu0
        %v770 = vpop.f32.mrf.mxu0
        %v771 = vadd.f32 0.0, %v770
        %v772 = vpop.f32.mrf.mxu0
        %773 = vdwg.mxu0
        %v774 = vadd.f32 %v597, %v712
        %v775 = vadd.f32 %v598, %v715
        %v776 = vadd.f32 %v599, %v720
        %v777 = vadd.f32 %v600, %v723
        %v778 = vadd.f32 %v601, %v728
        %v779 = vadd.f32 %v602, %v731
        %v780 = vadd.f32 %v603, %v736
        %v781 = vadd.f32 %v604, %v739
        %v782 = vadd.f32 %v605, %v744
        %v783 = vadd.f32 %v606, %v747
        %v784 = vadd.f32 %v607, %v752
        %v785 = vadd.f32 %v608, %v755
        %v786 = vadd.f32 %v609, %v760
        %v787 = vadd.f32 %v610, %v763
        %v788 = vadd.f32 %v611, %v768
        %v789 = vadd.f32 %v612, %v771
        %790 = vst [vmem:[#allocation2] sm:$0xff] %v774
        %791 = vst [vmem:[#allocation2 + $0x8] sm:$0xff] %v775
        %792 = vst [vmem:[#allocation2 + $0x10] sm:$0xff] %v776
        %793 = vst [vmem:[#allocation2 + $0x18] sm:$0xff] %v777
        %794 = vst [vmem:[#allocation2 + $0x20] sm:$0xff] %v778
        %795 = vst [vmem:[#allocation2 + $0x28] sm:$0xff] %v779
        %796 = vst [vmem:[#allocation2 + $0x30] sm:$0xff] %v780
        %797 = vst [vmem:[#allocation2 + $0x38] sm:$0xff] %v781
        %798 = vst [vmem:[#allocation2 + $0x40] sm:$0xff] %v782
        %799 = vst [vmem:[#allocation2 + $0x48] sm:$0xff] %v783
        %800 = vst [vmem:[#allocation2 + $0x50] sm:$0xff] %v784
        %801 = vst [vmem:[#allocation2 + $0x58] sm:$0xff] %v785
        %802 = vst [vmem:[#allocation2 + $0x60] sm:$0xff] %v786
        %803 = vst [vmem:[#allocation2 + $0x68] sm:$0xff] %v787
        %804 = vst [vmem:[#allocation2 + $0x70] sm:$0xff] %v788
        %805 = vst [vmem:[#allocation2 + $0x78] sm:$0xff] %v789
        %p806 = scmp.eq.s32.totalorder %s22, 3
        // Predicated region
        $region90: #{stochastic_two_layer_rgcn.2} parent=80 // pred_check
          %p807 = pneg %p806
        $region91: #{stochastic_two_layer_rgcn.2} parent=80 // pred_check_branch
          %809 = sbr.rel (%p807) target = $region93
        $region92: #{stochastic_two_layer_rgcn.2} parent=80 // pred_region
          %v810 = vld [vmem:[#allocation2] sm:$0xff]
          %v811 = vld [vmem:[#allocation2 + $0x8] sm:$0xff]
          %v812 = vld [vmem:[#allocation2 + $0x10] sm:$0xff]
          %v813 = vld [vmem:[#allocation2 + $0x18] sm:$0xff]
          %v814 = vld [vmem:[#allocation2 + $0x20] sm:$0xff]
          %v815 = vld [vmem:[#allocation2 + $0x28] sm:$0xff]
          %v816 = vld [vmem:[#allocation2 + $0x30] sm:$0xff]
          %v817 = vld [vmem:[#allocation2 + $0x38] sm:$0xff]
          %v818 = vld [vmem:[#allocation2 + $0x40] sm:$0xff]
          %v819 = vld [vmem:[#allocation2 + $0x48] sm:$0xff]
          %v820 = vld [vmem:[#allocation2 + $0x50] sm:$0xff]
          %v821 = vld [vmem:[#allocation2 + $0x58] sm:$0xff]
          %v822 = vld [vmem:[#allocation2 + $0x60] sm:$0xff]
          %v823 = vld [vmem:[#allocation2 + $0x68] sm:$0xff]
          %v824 = vld [vmem:[#allocation2 + $0x70] sm:$0xff]
          %v825 = vld [vmem:[#allocation2 + $0x78] sm:$0xff]
          %v826 = vld [vmem:[%s432] sm:$0xff]
          %v827 = vld [vmem:[%s432 + $0x8] sm:$0xff]
          %v828 = vld [vmem:[%s432 + $0x10] sm:$0xff]
          %v829 = vld [vmem:[%s432 + $0x18] sm:$0xff]
          %v830 = vld [vmem:[%s432 + $0x20] sm:$0xff]
          %v831 = vld [vmem:[%s432 + $0x28] sm:$0xff]
          %v832 = vld [vmem:[%s432 + $0x30] sm:$0xff]
          %v833 = vld [vmem:[%s432 + $0x38] sm:$0xff]
          %v834 = vld [vmem:[%s432 + $0x40] sm:$0xff]
          %v835 = vld [vmem:[%s432 + $0x48] sm:$0xff]
          %v836 = vld [vmem:[%s432 + $0x50] sm:$0xff]
          %v837 = vld [vmem:[%s432 + $0x58] sm:$0xff]
          %v838 = vld [vmem:[%s432 + $0x60] sm:$0xff]
          %v839 = vld [vmem:[%s432 + $0x68] sm:$0xff]
          %v840 = vld [vmem:[%s432 + $0x70] sm:$0xff]
          %v841 = vld [vmem:[%s432 + $0x78] sm:$0xff]
          %843 = vset.pattern.permute.xlu0 0
          %844 = vperm.xlu0 %843, %v826
          %v845 = vpop.permute.xlu0 %844
          %848 = vset.pattern.permute.xlu0 0
          %849 = vperm.xlu0 %848, %v827
          %v850 = vpop.permute.xlu0 %849
          %853 = vset.pattern.permute.xlu0 0
          %854 = vperm.xlu0 %853, %v828
          %v855 = vpop.permute.xlu0 %854
          %858 = vset.pattern.permute.xlu0 0
          %859 = vperm.xlu0 %858, %v829
          %v860 = vpop.permute.xlu0 %859
          %863 = vset.pattern.permute.xlu0 0
          %864 = vperm.xlu0 %863, %v830
          %v865 = vpop.permute.xlu0 %864
          %868 = vset.pattern.permute.xlu0 0
          %869 = vperm.xlu0 %868, %v831
          %v870 = vpop.permute.xlu0 %869
          %873 = vset.pattern.permute.xlu0 0
          %874 = vperm.xlu0 %873, %v832
          %v875 = vpop.permute.xlu0 %874
          %878 = vset.pattern.permute.xlu0 0
          %879 = vperm.xlu0 %878, %v833
          %v880 = vpop.permute.xlu0 %879
          %883 = vset.pattern.permute.xlu0 0
          %884 = vperm.xlu0 %883, %v834
          %v885 = vpop.permute.xlu0 %884
          %888 = vset.pattern.permute.xlu0 0
          %889 = vperm.xlu0 %888, %v835
          %v890 = vpop.permute.xlu0 %889
          %893 = vset.pattern.permute.xlu0 0
          %894 = vperm.xlu0 %893, %v836
          %v895 = vpop.permute.xlu0 %894
          %898 = vset.pattern.permute.xlu0 0
          %899 = vperm.xlu0 %898, %v837
          %v900 = vpop.permute.xlu0 %899
          %903 = vset.pattern.permute.xlu0 0
          %904 = vperm.xlu0 %903, %v838
          %v905 = vpop.permute.xlu0 %904
          %908 = vset.pattern.permute.xlu0 0
          %909 = vperm.xlu0 %908, %v839
          %v910 = vpop.permute.xlu0 %909
          %913 = vset.pattern.permute.xlu0 0
          %914 = vperm.xlu0 %913, %v840
          %v915 = vpop.permute.xlu0 %914
          %918 = vset.pattern.permute.xlu0 0
          %919 = vperm.xlu0 %918, %v841
          %v920 = vpop.permute.xlu0 %919
          %v922 = vmul.f32 %v810, %v845
          %v923 = vmul.f32 %v811, %v850
          %v924 = vmul.f32 %v812, %v855
          %v925 = vmul.f32 %v813, %v860
          %v926 = vmul.f32 %v814, %v865
          %v927 = vmul.f32 %v815, %v870
          %v928 = vmul.f32 %v816, %v875
          %v929 = vmul.f32 %v817, %v880
          %v930 = vmul.f32 %v818, %v885
          %v931 = vmul.f32 %v819, %v890
          %v932 = vmul.f32 %v820, %v895
          %v933 = vmul.f32 %v821, %v900
          %v934 = vmul.f32 %v822, %v905
          %v935 = vmul.f32 %v823, %v910
          %v936 = vmul.f32 %v824, %v915
          %v937 = vmul.f32 %v825, %v920
          %v938 = vpack.c.bf16 %v923, %v922
          %v939 = vpack.c.bf16 %v925, %v924
          %v940 = vpack.c.bf16 %v927, %v926
          %v941 = vpack.c.bf16 %v929, %v928
          %v942 = vpack.c.bf16 %v931, %v930
          %v943 = vpack.c.bf16 %v933, %v932
          %v944 = vpack.c.bf16 %v935, %v934
          %v945 = vpack.c.bf16 %v937, %v936
          %v946 = vld [vmem:[%s4] sm:$0xf]
          %v947 = vld [vmem:[%s4 + $0x4] sm:$0xf]
          %v948 = vld [vmem:[%s4 + $0x8] sm:$0xf]
          %v949 = vld [vmem:[%s4 + $0xc] sm:$0xf]
          %v950 = vld [vmem:[%s4 + $0x10] sm:$0xf]
          %v951 = vld [vmem:[%s4 + $0x14] sm:$0xf]
          %v952 = vld [vmem:[%s4 + $0x18] sm:$0xf]
          %v953 = vld [vmem:[%s4 + $0x1c] sm:$0xf]
          %v954 = vld [vmem:[%s4 + $0x20] sm:$0xf]
          %v955 = vld [vmem:[%s4 + $0x24] sm:$0xf]
          %v956 = vld [vmem:[%s4 + $0x28] sm:$0xf]
          %v957 = vld [vmem:[%s4 + $0x2c] sm:$0xf]
          %v958 = vld [vmem:[%s4 + $0x30] sm:$0xf]
          %v959 = vld [vmem:[%s4 + $0x34] sm:$0xf]
          %v960 = vld [vmem:[%s4 + $0x38] sm:$0xf]
          %v961 = vld [vmem:[%s4 + $0x3c] sm:$0xf]
          %v962 = vld [vmem:[%s5] sm:$0x1]
          %v964 = vlaneseq
          %v965 = vshrl.u32 %v964, 7
          %v966 = vsub.s32 0, %v965
          %v967 = vrot.slane %v962, %v966
          %v985 = vunpack.c.l.b16 %v946
          %v986 = vunpack.c.l.b16 %v947
          %v987 = vunpack.c.l.b16 %v948
          %v988 = vunpack.c.l.b16 %v949
          %v989 = vunpack.c.l.b16 %v950
          %v990 = vunpack.c.l.b16 %v951
          %v991 = vunpack.c.l.b16 %v952
          %v992 = vunpack.c.l.b16 %v953
          %v993 = vunpack.c.l.b16 %v954
          %v994 = vunpack.c.l.b16 %v955
          %v995 = vunpack.c.l.b16 %v956
          %v996 = vunpack.c.l.b16 %v957
          %v997 = vunpack.c.l.b16 %v958
          %v998 = vunpack.c.l.b16 %v959
          %v999 = vunpack.c.l.b16 %v960
          %v1000 = vunpack.c.l.b16 %v961
          %v1001 = vpack.c.b16 %v986, %v985
          %v1002 = vpack.c.b16 %v988, %v987
          %v1003 = vpack.c.b16 %v990, %v989
          %v1004 = vpack.c.b16 %v992, %v991
          %v1005 = vpack.c.b16 %v994, %v993
          %v1006 = vpack.c.b16 %v996, %v995
          %v1007 = vpack.c.b16 %v998, %v997
          %v1008 = vpack.c.b16 %v1000, %v999
          %1017 = vmatprep.subr.bf16.mxu0 0
          %1018 = vmatpush1.bf16.msra.mxu0 %v1008
          %1019 = vmatprep.subr.bf16.mxu0 0
          %1020 = vmatpush1.bf16.msra.mxu0 %v1007
          %1021 = vmatprep.subr.bf16.mxu0 0
          %1022 = vmatpush1.bf16.msra.mxu0 %v1006
          %1023 = vmatprep.subr.bf16.mxu0 0
          %1024 = vmatpush1.bf16.msra.mxu0 %v1005
          %1025 = vmatprep.subr.bf16.mxu0 0
          %1026 = vmatpush1.bf16.msra.mxu0 %v1004
          %1027 = vmatprep.subr.bf16.mxu0 0
          %1028 = vmatpush1.bf16.msra.mxu0 %v1003
          %1029 = vmatprep.subr.bf16.mxu0 0
          %1030 = vmatpush1.bf16.msra.mxu0 %v1002
          %1031 = vmatprep.subr.bf16.mxu0 0
          %1032 = vmatpush1.bf16.msra.mxu0 %v1001
          %1033 = vmatprep.subr.bf16.mxu0 0
          %1034 = vmatpush2.bf16.msra.mxu0 0
          %1035 = vmatprep.subr.bf16.mxu0 0
          %1036 = vmatpush2.bf16.msra.mxu0 0
          %1037 = vmatprep.subr.bf16.mxu0 0
          %1038 = vmatpush2.bf16.msra.mxu0 0
          %1039 = vmatprep.subr.bf16.mxu0 0
          %1040 = vmatpush2.bf16.msra.mxu0 0
          %1041 = vmatprep.subr.bf16.mxu0 0
          %1042 = vmatpush2.bf16.msra.mxu0 0
          %1043 = vmatprep.subr.bf16.mxu0 0
          %1044 = vmatpush2.bf16.msra.mxu0 0
          %1045 = vmatprep.subr.bf16.mxu0 0
          %1046 = vmatpush2.bf16.msra.mxu0 0
          %1047 = vmatprep.subr.bf16.mxu0 0
          %1048 = vmatpush2.bf16.msra.mxu0 0
          %1049 = vmatprep.mubr.bf16.mxu0 0
          %1050 = vmatmul.mubr.bf16.gmra.mxu0 %v938
          %v1051 = vpop.f32.mrf.mxu0
          %v1052 = vadd.f32 %v967, %v1051
          %v1053 = vpop.f32.mrf.mxu0
          %v1054 = vpop.f32.mrf.mxu0
          %v1055 = vadd.f32 %v967, %v1054
          %v1056 = vpop.f32.mrf.mxu0
          %1057 = vmatprep.mubr.bf16.mxu0 0
          %1058 = vmatmul.mubr.bf16.gmra.mxu0 %v939
          %v1059 = vpop.f32.mrf.mxu0
          %v1060 = vadd.f32 %v967, %v1059
          %v1061 = vpop.f32.mrf.mxu0
          %v1062 = vpop.f32.mrf.mxu0
          %v1063 = vadd.f32 %v967, %v1062
          %v1064 = vpop.f32.mrf.mxu0
          %1065 = vmatprep.mubr.bf16.mxu0 0
          %1066 = vmatmul.mubr.bf16.gmra.mxu0 %v940
          %v1067 = vpop.f32.mrf.mxu0
          %v1068 = vadd.f32 %v967, %v1067
          %v1069 = vpop.f32.mrf.mxu0
          %v1070 = vpop.f32.mrf.mxu0
          %v1071 = vadd.f32 %v967, %v1070
          %v1072 = vpop.f32.mrf.mxu0
          %1073 = vmatprep.mubr.bf16.mxu0 0
          %1074 = vmatmul.mubr.bf16.gmra.mxu0 %v941
          %v1075 = vpop.f32.mrf.mxu0
          %v1076 = vadd.f32 %v967, %v1075
          %v1077 = vpop.f32.mrf.mxu0
          %v1078 = vpop.f32.mrf.mxu0
          %v1079 = vadd.f32 %v967, %v1078
          %v1080 = vpop.f32.mrf.mxu0
          %1081 = vmatprep.mubr.bf16.mxu0 0
          %1082 = vmatmul.mubr.bf16.gmra.mxu0 %v942
          %v1083 = vpop.f32.mrf.mxu0
          %v1084 = vadd.f32 %v967, %v1083
          %v1085 = vpop.f32.mrf.mxu0
          %v1086 = vpop.f32.mrf.mxu0
          %v1087 = vadd.f32 %v967, %v1086
          %v1088 = vpop.f32.mrf.mxu0
          %1089 = vmatprep.mubr.bf16.mxu0 0
          %1090 = vmatmul.mubr.bf16.gmra.mxu0 %v943
          %v1091 = vpop.f32.mrf.mxu0
          %v1092 = vadd.f32 %v967, %v1091
          %v1093 = vpop.f32.mrf.mxu0
          %v1094 = vpop.f32.mrf.mxu0
          %v1095 = vadd.f32 %v967, %v1094
          %v1096 = vpop.f32.mrf.mxu0
          %1097 = vmatprep.mubr.bf16.mxu0 0
          %1098 = vmatmul.mubr.bf16.gmra.mxu0 %v944
          %v1099 = vpop.f32.mrf.mxu0
          %v1100 = vadd.f32 %v967, %v1099
          %v1101 = vpop.f32.mrf.mxu0
          %v1102 = vpop.f32.mrf.mxu0
          %v1103 = vadd.f32 %v967, %v1102
          %v1104 = vpop.f32.mrf.mxu0
          %1105 = vmatprep.mubr.bf16.mxu0 0
          %1106 = vmatmul.mubr.bf16.gmra.mxu0 %v945
          %v1107 = vpop.f32.mrf.mxu0
          %v1108 = vadd.f32 %v967, %v1107
          %v1109 = vpop.f32.mrf.mxu0
          %v1110 = vpop.f32.mrf.mxu0
          %v1111 = vadd.f32 %v967, %v1110
          %v1112 = vpop.f32.mrf.mxu0
          %1113 = vdwg.mxu0
          %v1114 = vmax.f32 %v1052, 0.0
          %v1115 = vmax.f32 %v1055, 0.0
          %v1116 = vmax.f32 %v1060, 0.0
          %v1117 = vmax.f32 %v1063, 0.0
          %v1118 = vmax.f32 %v1068, 0.0
          %v1119 = vmax.f32 %v1071, 0.0
          %v1120 = vmax.f32 %v1076, 0.0
          %v1121 = vmax.f32 %v1079, 0.0
          %v1122 = vmax.f32 %v1084, 0.0
          %v1123 = vmax.f32 %v1087, 0.0
          %v1124 = vmax.f32 %v1092, 0.0
          %v1125 = vmax.f32 %v1095, 0.0
          %v1126 = vmax.f32 %v1100, 0.0
          %v1127 = vmax.f32 %v1103, 0.0
          %v1128 = vmax.f32 %v1108, 0.0
          %v1129 = vmax.f32 %v1111, 0.0
          %v1130 = vpack.c.bf16 %v1115, %v1114
          %v1131 = vpack.c.bf16 %v1117, %v1116
          %v1132 = vpack.c.bf16 %v1119, %v1118
          %v1133 = vpack.c.bf16 %v1121, %v1120
          %v1134 = vpack.c.bf16 %v1123, %v1122
          %v1135 = vpack.c.bf16 %v1125, %v1124
          %v1136 = vpack.c.bf16 %v1127, %v1126
          %v1137 = vpack.c.bf16 %v1129, %v1128
          %v1146 = vunpack.c.l.b16 %v1130
          %v1147 = vunpack.c.h.b16 %v1130
          %v1148 = vunpack.c.l.b16 %v1131
          %v1149 = vunpack.c.h.b16 %v1131
          %v1150 = vunpack.c.l.b16 %v1132
          %v1151 = vunpack.c.h.b16 %v1132
          %v1152 = vunpack.c.l.b16 %v1133
          %v1153 = vunpack.c.h.b16 %v1133
          %v1154 = vunpack.c.l.b16 %v1134
          %v1155 = vunpack.c.h.b16 %v1134
          %v1156 = vunpack.c.l.b16 %v1135
          %v1157 = vunpack.c.h.b16 %v1135
          %v1158 = vunpack.c.l.b16 %v1136
          %v1159 = vunpack.c.h.b16 %v1136
          %v1160 = vunpack.c.l.b16 %v1137
          %v1161 = vunpack.c.h.b16 %v1137
          %v1162 = vpack.c.b16 %v1146, %v1146
          %v1163 = vpack.c.b16 %v1147, %v1147
          %v1164 = vpack.c.b16 %v1148, %v1148
          %v1165 = vpack.c.b16 %v1149, %v1149
          %v1166 = vpack.c.b16 %v1150, %v1150
          %v1167 = vpack.c.b16 %v1151, %v1151
          %v1168 = vpack.c.b16 %v1152, %v1152
          %v1169 = vpack.c.b16 %v1153, %v1153
          %v1170 = vpack.c.b16 %v1154, %v1154
          %v1171 = vpack.c.b16 %v1155, %v1155
          %v1172 = vpack.c.b16 %v1156, %v1156
          %v1173 = vpack.c.b16 %v1157, %v1157
          %v1174 = vpack.c.b16 %v1158, %v1158
          %v1175 = vpack.c.b16 %v1159, %v1159
          %v1176 = vpack.c.b16 %v1160, %v1160
          %v1177 = vpack.c.b16 %v1161, %v1161
          %1194 = vst [vmem:[%s438] sm:$0xf] %v1162
          %1195 = vst [vmem:[%s438 + $0x4] sm:$0xf] %v1163
          %1196 = vst [vmem:[%s438 + $0x8] sm:$0xf] %v1164
          %1197 = vst [vmem:[%s438 + $0xc] sm:$0xf] %v1165
          %1198 = vst [vmem:[%s438 + $0x10] sm:$0xf] %v1166
          %1199 = vst [vmem:[%s438 + $0x14] sm:$0xf] %v1167
          %1200 = vst [vmem:[%s438 + $0x18] sm:$0xf] %v1168
          %1201 = vst [vmem:[%s438 + $0x1c] sm:$0xf] %v1169
          %1202 = vst [vmem:[%s438 + $0x20] sm:$0xf] %v1170
          %1203 = vst [vmem:[%s438 + $0x24] sm:$0xf] %v1171
          %1204 = vst [vmem:[%s438 + $0x28] sm:$0xf] %v1172
          %1205 = vst [vmem:[%s438 + $0x2c] sm:$0xf] %v1173
          %1206 = vst [vmem:[%s438 + $0x30] sm:$0xf] %v1174
          %1207 = vst [vmem:[%s438 + $0x34] sm:$0xf] %v1175
          %1208 = vst [vmem:[%s438 + $0x38] sm:$0xf] %v1176
          %1209 = vst [vmem:[%s438 + $0x3c] sm:$0xf] %v1177
        $region93: #{stochastic_two_layer_rgcn.2} parent=80 // pred_fallthru
          _
        %s1210 = smul.u32 16, %s21
        %p1211 = scmp.lt.s32.totalorder %s1210, 47
        %s1212 = scalar_select %p1211, %s1210, 47
        %s1213 = smul.addr %s1212, 4
        %s1214 = scalar_lea.vmem %s6, %s1213
        // Predicated region
        $region94: #{stochastic_two_layer_rgcn.2} parent=80 // pred_check
          %p1215 = pneg %p195
        $region95: #{stochastic_two_layer_rgcn.2} parent=80 // pred_check_branch
          %1217 = sbr.rel (%p1215) target = $region97
        $region96: #{stochastic_two_layer_rgcn.2} parent=80 // pred_region
          %s1218 = smul.u32 16, %s21
        $region97: #{stochastic_two_layer_rgcn.2} parent=80 // pred_fallthru
          _
      $region81: #{stochastic_two_layer_rgcn.2} parent=5 // pred_fallthru
        _
      %p1219 = scmp.le.s32.totalorder 2, %s12
      // Predicated region
      $region98: #{stochastic_two_layer_rgcn.2} parent=5 // pred_check
        %p1220 = pneg %p1219
      $region99: #{stochastic_two_layer_rgcn.2} parent=5 // pred_check_branch
        %1222 = sbr.rel (%p1220) target = $region101
      $region100: #{stochastic_two_layer_rgcn.2} parent=5 // pred_region
        %s1223 = ssub.s32 %s12, 2
        // Predicated region
        $region102: #{stochastic_two_layer_rgcn.2} parent=100 // pred_check
          %p1224 = pneg %p201
        $region103: #{stochastic_two_layer_rgcn.2} parent=100 // pred_check_branch
          %1226 = sbr.rel (%p1224) target = $region105
        $region104: #{stochastic_two_layer_rgcn.2} parent=100 // pred_region
          %s1227 = smul.u32 16, %s23
          %p1228 = scmp.lt.s32.totalorder %s1227, 47
          %s1229 = scalar_select %p1228, %s1227, 47
          %s1230 = smul.addr %s1229, 4
          %s1231 = scalar_lea.vmem %s6, %s1230
        $region105: #{stochastic_two_layer_rgcn.2} parent=100 // pred_fallthru
          _
      $region101: #{stochastic_two_layer_rgcn.2} parent=5 // pred_fallthru
        _
    $region6: #{stochastic_two_layer_rgcn.2} parent=1 // loop_footer
      %s16 = sadd.s32 1, %s12
    $region7: #{stochastic_two_layer_rgcn.2} parent=1 // loop_footer_branch
      %11 = sbr.rel target = $region3
    $region8: #{stochastic_two_layer_rgcn.2} parent=1 // loop_exit
      _

</llo_original>
